<compile_context>
chip_gen: v7x
topology: tpu7x:2x2x1
jax: 0.10.0
libtpu: 0.0.40
codegen_flags: <defaults>
</compile_context>

<pallas_src>
import jax
import jax.numpy as jnp
from jax.experimental import pallas as pl
from jax.experimental.pallas import tpu as pltpu

C_IN, C_OUT, K = 6, 3, 3
IMAGENET_MEAN = (0.485, 0.456, 0.406)
IMAGENET_STD = (0.229, 0.224, 0.225)

# Per-grid-step VMEM budget: ~1/3 of v7x's 64 MiB physical VMEM per TC (and well
# inside v5e/v6e's 128 MiB).  vmem_limit_bytes is raised above the default
# scoped limit (16 MiB on v5e) but kept under v7x's 32 MiB default.
_VMEM_STEP_BUDGET = 20 * 1024 * 1024
_VMEM_LIMIT_BYTES = 28 * 1024 * 1024


def _adapter_kernel(x_ref, w_ref, b_ref, o_ref):
    # x_ref : (NB, C_IN, H, W)  VMEM   input tile (W on lanes, H on sublanes)
    # w_ref : (C_OUT*C_IN*K*K,) SMEM   conv weights pre-scaled by 1/std
    # b_ref : (C_OUT,)          SMEM   (bias - mean) / std
    # o_ref : (NB, C_OUT, H, W) VMEM
    H, W = x_ref.shape[2], x_ref.shape[3]

    # Boundary masks for the zero "same" padding: hoisted, built ONCE per step
    # (4 vcmp) and reused in every jnp.where below.
    row = jax.lax.broadcasted_iota(jnp.int32, (1, H, W), 1)
    col = jax.lax.broadcasted_iota(jnp.int32, (1, H, W), 2)
    row_lo = row >= 1        # valid rows when the plane is shifted down (tap oh = -1)
    row_hi = row < H - 1     # valid rows when the plane is shifted up   (tap oh = +1)
    col_lo = col >= 1        # valid cols when shifted right             (tap ow = -1)
    col_hi = col < W - 1     # valid cols when shifted left              (tap ow = +1)

    # Seed the accumulators from the center tap of input channel 0
    # (no roll, no mask) instead of materializing zero planes.
    xc0 = x_ref[:, 0, :, :].astype(jnp.float32)                  # (nb, H, W)
    accs = [w_ref[(co * C_IN + 0) * K * K + 1 * K + 1] * xc0 for co in range(C_OUT)]

    for ci in range(C_IN):
        xc = xc0 if ci == 0 else x_ref[:, ci, :, :].astype(jnp.float32)
        for dh in range(K):
            oh = dh - 1                                          # tap row offset
            if oh == 0:
                xh = xc
            else:
                xh = pltpu.roll(xc, shift=(-oh) % H, axis=1)     # sublane roll (XLU)
                xh = jnp.where(row_hi if oh == 1 else row_lo, xh, 0.0)
            for dw in range(K):
                ow = dw - 1                                      # tap col offset
                if ci == 0 and oh == 0 and ow == 0:
                    continue                                     # folded into the init
                if ow == 0:
                    sh = xh
                else:
                    sh = pltpu.roll(xh, shift=(-ow) % W, axis=2)  # lane roll (XLU)
                    sh = jnp.where(col_hi if ow == 1 else col_lo, sh, 0.0)
                # Shifted plane is consumed immediately (keeps live vreg set small,
                # avoids spills that would saturate v5e's single store slot).
                for co in range(C_OUT):
                    wt = w_ref[((co * C_IN + ci) * K + dh) * K + dw]
                    accs[co] = accs[co] + wt * sh                # scalar-weight FMA (VPU)

    for co in range(C_OUT):
        o_ref[:, co, :, :] = (accs[co] + b_ref[co]).astype(o_ref.dtype)


def _pick_batch_block(N, H, W, in_itemsize):
    """Largest batch block fitting the per-step VMEM budget, with grid >= 2."""
    lanes = pl.cdiv(W, 128) * 128
    sublanes = pl.cdiv(H, 8) * 8
    in_plane = sublanes * lanes * in_itemsize
    f32_plane = sublanes * lanes * 4
    # Real per-step accounting: BlockSpec double-buffers input and output blocks,
    # plus C_OUT f32 accumulator planes and ~3 shifted-plane temporaries.
    per_img = (2 * C_IN * in_plane          # double-buffered input block
               + 2 * C_OUT * f32_plane      # double-buffered output block
               + (C_OUT + 3) * f32_plane)   # accumulators + shift temporaries
    nb = max(1, min(N, _VMEM_STEP_BUDGET // per_img))
    # Keep at least 2 grid steps so dimension_semantics=("parallel",) can
    # shard the batch axis across both v7x TensorCores.
    if N >= 2:
        nb = min(nb, (N + 1) // 2)
    return nb


def augment_inputs_pallas(x_nchw, w_oihw, bias, *, batch_block=None):
    """x_nchw: (N, 6, H, W) any float/int dtype.  Returns (N, 3, H, W) float32 (NCHW)."""
    N, Cin, H, W = x_nchw.shape
    assert Cin == C_IN

    mean = jnp.asarray(IMAGENET_MEAN, jnp.float32)
    inv_std = 1.0 / jnp.asarray(IMAGENET_STD, jnp.float32)

    # Fold normalize into conv params:
    #   (conv(x, w) + b - mean) / std == conv(x, w/std) + (b - mean)/std
    w_fold = (w_oihw.astype(jnp.float32) * inv_std[:, None, None, None]).reshape(-1)
    b_fold = (bias.astype(jnp.float32) - mean) * inv_std

    if batch_block is None:
        nb = _pick_batch_block(N, H, W, jnp.dtype(x_nchw.dtype).itemsize)
    else:
        nb = batch_block
    grid = pl.cdiv(N, nb)   # partial trailing block handled by Pallas; no N % nb req.

    return pl.pallas_call(
        _adapter_kernel,
        out_shape=jax.ShapeDtypeStruct((N, C_OUT, H, W), jnp.float32),
        grid=(grid,),
        in_specs=[
            pl.BlockSpec((nb, C_IN, H, W), lambda n: (n, 0, 0, 0)),
            pl.BlockSpec(memory_space=pltpu.MemorySpace.SMEM),
            pl.BlockSpec(memory_space=pltpu.MemorySpace.SMEM),
        ],
        out_specs=pl.BlockSpec((nb, C_OUT, H, W), lambda n: (n, 0, 0, 0)),
        compiler_params=pltpu.CompilerParams(
            dimension_semantics=("parallel",),
            vmem_limit_bytes=_VMEM_LIMIT_BYTES),
        # No wrapper-side astype: input is DMA'd in its native dtype and cast
        # per-tile inside the kernel (saves a full HBM pass for uint8/bf16 frames).
    )(x_nchw, w_fold, b_fold)


def _reference(x_nchw, w_oihw, bias):
    y = jax.lax.conv_general_dilated(
        x_nchw.astype(jnp.float32), w_oihw, window_strides=(1, 1), padding="SAME",
        dimension_numbers=("NCHW", "OIHW", "NCHW"))
    y = y + bias.reshape(1, C_OUT, 1, 1)
    mean = jnp.asarray(IMAGENET_MEAN, jnp.float32).reshape(1, C_OUT, 1, 1)
    std = jnp.asarray(IMAGENET_STD, jnp.float32).reshape(1, C_OUT, 1, 1)
    return (y - mean) / std


if __name__ == "__main__":
    key = jax.random.PRNGKey(0)
    kx, kw, kb = jax.random.split(key, 3)

    N, H, W = 2, 16, 16
    x = jax.random.normal(kx, (N, C_IN, H, W), dtype=jnp.float32)

    # Deterministic parameter init (matches Conv2d(6, 3, 3) shapes).
    fan_in = C_IN * K * K
    bound = 1.0 / (fan_in ** 0.5)
    w = jax.random.uniform(kw, (C_OUT, C_IN, K, K), jnp.float32, -bound, bound)
    b = jax.random.uniform(kb, (C_OUT,), jnp.float32, -bound, bound)

    out = augment_inputs_pallas(x, w, b)
    out = jax.block_until_ready(out)

    ref = _reference(x, w, b)
    assert out.shape == (N, C_OUT, H, W)
    assert jnp.allclose(out, ref, rtol=1e-4, atol=1e-4), "mismatch vs reference"

    print("KERNEL_OK")
</pallas_src>

<mosaic_0001>
module attributes {stable_mosaic.version = 11 : i64} {
  func.func @_adapter_kernel(%arg0: i32, %arg1: memref<1x6x16x16xf32, #tpu.memory_space<vmem>>, %arg2: memref<162xf32, #tpu.memory_space<smem>>, %arg3: memref<3xf32, #tpu.memory_space<smem>>, %arg4: memref<1x3x16x16xf32, #tpu.memory_space<vmem>>) attributes {dimension_semantics = [#tpu.dimension_semantics<parallel>], iteration_bounds = array<i64: 2>, scalar_prefetch = 0 : i64, scratch_operands = 0 : i64, tpu.core_type = #tpu.core_type<tc>, window_params = [{transform_indices = @transform_0, window_bounds = array<i64: 1, 6, 16, 16>}, {transform_indices = @transform_1, window_bounds = array<i64: 162>}, {transform_indices = @transform_2, window_bounds = array<i64: 3>}, {transform_indices = @transform_3, window_bounds = array<i64: 1, 3, 16, 16>}]} {
    %0 = tpu.iota {dimensions = array<i32: 1>} : vector<1x16x16xi32>
    %1 = tpu.iota {dimensions = array<i32: 2>} : vector<1x16x16xi32>
    %c1_i32 = arith.constant 1 : i32
    %2 = vector.broadcast %c1_i32 : i32 to vector<1x16x16xi32>
    %3 = arith.cmpi sge, %0, %2 : vector<1x16x16xi32>
    %c15_i32 = arith.constant 15 : i32
    %4 = vector.broadcast %c15_i32 : i32 to vector<1x16x16xi32>
    %5 = arith.cmpi slt, %0, %4 : vector<1x16x16xi32>
    %c1_i32_0 = arith.constant 1 : i32
    %6 = vector.broadcast %c1_i32_0 : i32 to vector<1x16x16xi32>
    %7 = arith.cmpi sge, %1, %6 : vector<1x16x16xi32>
    %c15_i32_1 = arith.constant 15 : i32
    %8 = vector.broadcast %c15_i32_1 : i32 to vector<1x16x16xi32>
    %9 = arith.cmpi slt, %1, %8 : vector<1x16x16xi32>
    %c0 = arith.constant 0 : index
    %c0_2 = arith.constant 0 : index
    %c0_3 = arith.constant 0 : index
    %c0_4 = arith.constant 0 : index
    %10 = vector.load %arg1[%c0, %c0_2, %c0_3, %c0_4] : memref<1x6x16x16xf32, #tpu.memory_space<vmem>>, vector<1x1x16x16xf32>
    %11 = vector.shape_cast %10 : vector<1x1x16x16xf32> to vector<1x16x16xf32>
    %c4 = arith.constant 4 : index
    %12 = memref.load %arg2[%c4] : memref<162xf32, #tpu.memory_space<smem>>
    %13 = vector.broadcast %12 : f32 to vector<1x16x16xf32>
    %14 = arith.mulf %13, %11 : vector<1x16x16xf32>
    %c58 = arith.constant 58 : index
    %15 = memref.load %arg2[%c58] : memref<162xf32, #tpu.memory_space<smem>>
    %16 = vector.broadcast %15 : f32 to vector<1x16x16xf32>
    %17 = arith.mulf %16, %11 : vector<1x16x16xf32>
    %c112 = arith.constant 112 : index
    %18 = memref.load %arg2[%c112] : memref<162xf32, #tpu.memory_space<smem>>
    %19 = vector.broadcast %18 : f32 to vector<1x16x16xf32>
    %20 = arith.mulf %19, %11 : vector<1x16x16xf32>
    %c1_i32_5 = arith.constant 1 : i32
    %21 = tpu.dynamic_rotate %11 by %c1_i32_5 dim 1 : vector<1x16x16xf32>, i32 -> vector<1x16x16xf32>
    %cst = arith.constant 0.000000e+00 : f32
    %22 = vector.broadcast %cst : f32 to vector<1x16x16xf32>
    %23 = arith.select %3, %21, %22 : vector<1x16x16xi1>, vector<1x16x16xf32>
    %c1_i32_6 = arith.constant 1 : i32
    %24 = tpu.dynamic_rotate %23 by %c1_i32_6 dim 2 : vector<1x16x16xf32>, i32 -> vector<1x16x16xf32>
    %cst_7 = arith.constant 0.000000e+00 : f32
    %25 = vector.broadcast %cst_7 : f32 to vector<1x16x16xf32>
    %26 = arith.select %7, %24, %25 : vector<1x16x16xi1>, vector<1x16x16xf32>
    %c0_8 = arith.constant 0 : index
    %27 = memref.load %arg2[%c0_8] : memref<162xf32, #tpu.memory_space<smem>>
    %28 = vector.broadcast %27 : f32 to vector<1x16x16xf32>
    %29 = arith.mulf %28, %26 : vector<1x16x16xf32>
    %30 = arith.addf %14, %29 : vector<1x16x16xf32>
    %c54 = arith.constant 54 : index
    %31 = memref.load %arg2[%c54] : memref<162xf32, #tpu.memory_space<smem>>
    %32 = vector.broadcast %31 : f32 to vector<1x16x16xf32>
    %33 = arith.mulf %32, %26 : vector<1x16x16xf32>
    %34 = arith.addf %17, %33 : vector<1x16x16xf32>
    %c108 = arith.constant 108 : index
    %35 = memref.load %arg2[%c108] : memref<162xf32, #tpu.memory_space<smem>>
    %36 = vector.broadcast %35 : f32 to vector<1x16x16xf32>
    %37 = arith.mulf %36, %26 : vector<1x16x16xf32>
    %38 = arith.addf %20, %37 : vector<1x16x16xf32>
    %c1 = arith.constant 1 : index
    %39 = memref.load %arg2[%c1] : memref<162xf32, #tpu.memory_space<smem>>
    %40 = vector.broadcast %39 : f32 to vector<1x16x16xf32>
    %41 = arith.mulf %40, %23 : vector<1x16x16xf32>
    %42 = arith.addf %30, %41 : vector<1x16x16xf32>
    %c55 = arith.constant 55 : index
    %43 = memref.load %arg2[%c55] : memref<162xf32, #tpu.memory_space<smem>>
    %44 = vector.broadcast %43 : f32 to vector<1x16x16xf32>
    %45 = arith.mulf %44, %23 : vector<1x16x16xf32>
    %46 = arith.addf %34, %45 : vector<1x16x16xf32>
    %c109 = arith.constant 109 : index
    %47 = memref.load %arg2[%c109] : memref<162xf32, #tpu.memory_space<smem>>
    %48 = vector.broadcast %47 : f32 to vector<1x16x16xf32>
    %49 = arith.mulf %48, %23 : vector<1x16x16xf32>
    %50 = arith.addf %38, %49 : vector<1x16x16xf32>
    %c15_i32_9 = arith.constant 15 : i32
    %51 = tpu.dynamic_rotate %23 by %c15_i32_9 dim 2 : vector<1x16x16xf32>, i32 -> vector<1x16x16xf32>
    %cst_10 = arith.constant 0.000000e+00 : f32
    %52 = vector.broadcast %cst_10 : f32 to vector<1x16x16xf32>
    %53 = arith.select %9, %51, %52 : vector<1x16x16xi1>, vector<1x16x16xf32>
    %c2 = arith.constant 2 : index
    %54 = memref.load %arg2[%c2] : memref<162xf32, #tpu.memory_space<smem>>
    %55 = vector.broadcast %54 : f32 to vector<1x16x16xf32>
    %56 = arith.mulf %55, %53 : vector<1x16x16xf32>
    %57 = arith.addf %42, %56 : vector<1x16x16xf32>
    %c56 = arith.constant 56 : index
    %58 = memref.load %arg2[%c56] : memref<162xf32, #tpu.memory_space<smem>>
    %59 = vector.broadcast %58 : f32 to vector<1x16x16xf32>
    %60 = arith.mulf %59, %53 : vector<1x16x16xf32>
    %61 = arith.addf %46, %60 : vector<1x16x16xf32>
    %c110 = arith.constant 110 : index
    %62 = memref.load %arg2[%c110] : memref<162xf32, #tpu.memory_space<smem>>
    %63 = vector.broadcast %62 : f32 to vector<1x16x16xf32>
    %64 = arith.mulf %63, %53 : vector<1x16x16xf32>
    %65 = arith.addf %50, %64 : vector<1x16x16xf32>
    %c1_i32_11 = arith.constant 1 : i32
    %66 = tpu.dynamic_rotate %11 by %c1_i32_11 dim 2 : vector<1x16x16xf32>, i32 -> vector<1x16x16xf32>
    %cst_12 = arith.constant 0.000000e+00 : f32
    %67 = vector.broadcast %cst_12 : f32 to vector<1x16x16xf32>
    %68 = arith.select %7, %66, %67 : vector<1x16x16xi1>, vector<1x16x16xf32>
    %c3 = arith.constant 3 : index
    %69 = memref.load %arg2[%c3] : memref<162xf32, #tpu.memory_space<smem>>
    %70 = vector.broadcast %69 : f32 to vector<1x16x16xf32>
    %71 = arith.mulf %70, %68 : vector<1x16x16xf32>
    %72 = arith.addf %57, %71 : vector<1x16x16xf32>
    %c57 = arith.constant 57 : index
    %73 = memref.load %arg2[%c57] : memref<162xf32, #tpu.memory_space<smem>>
    %74 = vector.broadcast %73 : f32 to vector<1x16x16xf32>
    %75 = arith.mulf %74, %68 : vector<1x16x16xf32>
    %76 = arith.addf %61, %75 : vector<1x16x16xf32>
    %c111 = arith.constant 111 : index
    %77 = memref.load %arg2[%c111] : memref<162xf32, #tpu.memory_space<smem>>
    %78 = vector.broadcast %77 : f32 to vector<1x16x16xf32>
    %79 = arith.mulf %78, %68 : vector<1x16x16xf32>
    %80 = arith.addf %65, %79 : vector<1x16x16xf32>
    %c15_i32_13 = arith.constant 15 : i32
    %81 = tpu.dynamic_rotate %11 by %c15_i32_13 dim 2 : vector<1x16x16xf32>, i32 -> vector<1x16x16xf32>
    %cst_14 = arith.constant 0.000000e+00 : f32
    %82 = vector.broadcast %cst_14 : f32 to vector<1x16x16xf32>
    %83 = arith.select %9, %81, %82 : vector<1x16x16xi1>, vector<1x16x16xf32>
    %c5 = arith.constant 5 : index
    %84 = memref.load %arg2[%c5] : memref<162xf32, #tpu.memory_space<smem>>
    %85 = vector.broadcast %84 : f32 to vector<1x16x16xf32>
    %86 = arith.mulf %85, %83 : vector<1x16x16xf32>
    %87 = arith.addf %72, %86 : vector<1x16x16xf32>
    %c59 = arith.constant 59 : index
    %88 = memref.load %arg2[%c59] : memref<162xf32, #tpu.memory_space<smem>>
    %89 = vector.broadcast %88 : f32 to vector<1x16x16xf32>
    %90 = arith.mulf %89, %83 : vector<1x16x16xf32>
    %91 = arith.addf %76, %90 : vector<1x16x16xf32>
    %c113 = arith.constant 113 : index
    %92 = memref.load %arg2[%c113] : memref<162xf32, #tpu.memory_space<smem>>
    %93 = vector.broadcast %92 : f32 to vector<1x16x16xf32>
    %94 = arith.mulf %93, %83 : vector<1x16x16xf32>
    %95 = arith.addf %80, %94 : vector<1x16x16xf32>
    %c15_i32_15 = arith.constant 15 : i32
    %96 = tpu.dynamic_rotate %11 by %c15_i32_15 dim 1 : vector<1x16x16xf32>, i32 -> vector<1x16x16xf32>
    %cst_16 = arith.constant 0.000000e+00 : f32
    %97 = vector.broadcast %cst_16 : f32 to vector<1x16x16xf32>
    %98 = arith.select %5, %96, %97 : vector<1x16x16xi1>, vector<1x16x16xf32>
    %c1_i32_17 = arith.constant 1 : i32
    %99 = tpu.dynamic_rotate %98 by %c1_i32_17 dim 2 : vector<1x16x16xf32>, i32 -> vector<1x16x16xf32>
    %cst_18 = arith.constant 0.000000e+00 : f32
    %100 = vector.broadcast %cst_18 : f32 to vector<1x16x16xf32>
    %101 = arith.select %7, %99, %100 : vector<1x16x16xi1>, vector<1x16x16xf32>
    %c6 = arith.constant 6 : index
    %102 = memref.load %arg2[%c6] : memref<162xf32, #tpu.memory_space<smem>>
    %103 = vector.broadcast %102 : f32 to vector<1x16x16xf32>
    %104 = arith.mulf %103, %101 : vector<1x16x16xf32>
    %105 = arith.addf %87, %104 : vector<1x16x16xf32>
    %c60 = arith.constant 60 : index
    %106 = memref.load %arg2[%c60] : memref<162xf32, #tpu.memory_space<smem>>
    %107 = vector.broadcast %106 : f32 to vector<1x16x16xf32>
    %108 = arith.mulf %107, %101 : vector<1x16x16xf32>
    %109 = arith.addf %91, %108 : vector<1x16x16xf32>
    %c114 = arith.constant 114 : index
    %110 = memref.load %arg2[%c114] : memref<162xf32, #tpu.memory_space<smem>>
    %111 = vector.broadcast %110 : f32 to vector<1x16x16xf32>
    %112 = arith.mulf %111, %101 : vector<1x16x16xf32>
    %113 = arith.addf %95, %112 : vector<1x16x16xf32>
    %c7 = arith.constant 7 : index
    %114 = memref.load %arg2[%c7] : memref<162xf32, #tpu.memory_space<smem>>
    %115 = vector.broadcast %114 : f32 to vector<1x16x16xf32>
    %116 = arith.mulf %115, %98 : vector<1x16x16xf32>
    %117 = arith.addf %105, %116 : vector<1x16x16xf32>
    %c61 = arith.constant 61 : index
    %118 = memref.load %arg2[%c61] : memref<162xf32, #tpu.memory_space<smem>>
    %119 = vector.broadcast %118 : f32 to vector<1x16x16xf32>
    %120 = arith.mulf %119, %98 : vector<1x16x16xf32>
    %121 = arith.addf %109, %120 : vector<1x16x16xf32>
    %c115 = arith.constant 115 : index
    %122 = memref.load %arg2[%c115] : memref<162xf32, #tpu.memory_space<smem>>
    %123 = vector.broadcast %122 : f32 to vector<1x16x16xf32>
    %124 = arith.mulf %123, %98 : vector<1x16x16xf32>
    %125 = arith.addf %113, %124 : vector<1x16x16xf32>
    %c15_i32_19 = arith.constant 15 : i32
    %126 = tpu.dynamic_rotate %98 by %c15_i32_19 dim 2 : vector<1x16x16xf32>, i32 -> vector<1x16x16xf32>
    %cst_20 = arith.constant 0.000000e+00 : f32
    %127 = vector.broadcast %cst_20 : f32 to vector<1x16x16xf32>
    %128 = arith.select %9, %126, %127 : vector<1x16x16xi1>, vector<1x16x16xf32>
    %c8 = arith.constant 8 : index
    %129 = memref.load %arg2[%c8] : memref<162xf32, #tpu.memory_space<smem>>
    %130 = vector.broadcast %129 : f32 to vector<1x16x16xf32>
    %131 = arith.mulf %130, %128 : vector<1x16x16xf32>
    %132 = arith.addf %117, %131 : vector<1x16x16xf32>
    %c62 = arith.constant 62 : index
    %133 = memref.load %arg2[%c62] : memref<162xf32, #tpu.memory_space<smem>>
    %134 = vector.broadcast %133 : f32 to vector<1x16x16xf32>
    %135 = arith.mulf %134, %128 : vector<1x16x16xf32>
    %136 = arith.addf %121, %135 : vector<1x16x16xf32>
    %c116 = arith.constant 116 : index
    %137 = memref.load %arg2[%c116] : memref<162xf32, #tpu.memory_space<smem>>
    %138 = vector.broadcast %137 : f32 to vector<1x16x16xf32>
    %139 = arith.mulf %138, %128 : vector<1x16x16xf32>
    %140 = arith.addf %125, %139 : vector<1x16x16xf32>
    %c0_21 = arith.constant 0 : index
    %c1_22 = arith.constant 1 : index
    %c0_23 = arith.constant 0 : index
    %c0_24 = arith.constant 0 : index
    %141 = vector.load %arg1[%c0_21, %c1_22, %c0_23, %c0_24] : memref<1x6x16x16xf32, #tpu.memory_space<vmem>>, vector<1x1x16x16xf32>
    %142 = vector.shape_cast %141 : vector<1x1x16x16xf32> to vector<1x16x16xf32>
    %c1_i32_25 = arith.constant 1 : i32
    %143 = tpu.dynamic_rotate %142 by %c1_i32_25 dim 1 : vector<1x16x16xf32>, i32 -> vector<1x16x16xf32>
    %cst_26 = arith.constant 0.000000e+00 : f32
    %144 = vector.broadcast %cst_26 : f32 to vector<1x16x16xf32>
    %145 = arith.select %3, %143, %144 : vector<1x16x16xi1>, vector<1x16x16xf32>
    %c1_i32_27 = arith.constant 1 : i32
    %146 = tpu.dynamic_rotate %145 by %c1_i32_27 dim 2 : vector<1x16x16xf32>, i32 -> vector<1x16x16xf32>
    %cst_28 = arith.constant 0.000000e+00 : f32
    %147 = vector.broadcast %cst_28 : f32 to vector<1x16x16xf32>
    %148 = arith.select %7, %146, %147 : vector<1x16x16xi1>, vector<1x16x16xf32>
    %c9 = arith.constant 9 : index
    %149 = memref.load %arg2[%c9] : memref<162xf32, #tpu.memory_space<smem>>
    %150 = vector.broadcast %149 : f32 to vector<1x16x16xf32>
    %151 = arith.mulf %150, %148 : vector<1x16x16xf32>
    %152 = arith.addf %132, %151 : vector<1x16x16xf32>
    %c63 = arith.constant 63 : index
    %153 = memref.load %arg2[%c63] : memref<162xf32, #tpu.memory_space<smem>>
    %154 = vector.broadcast %153 : f32 to vector<1x16x16xf32>
    %155 = arith.mulf %154, %148 : vector<1x16x16xf32>
    %156 = arith.addf %136, %155 : vector<1x16x16xf32>
    %c117 = arith.constant 117 : index
    %157 = memref.load %arg2[%c117] : memref<162xf32, #tpu.memory_space<smem>>
    %158 = vector.broadcast %157 : f32 to vector<1x16x16xf32>
    %159 = arith.mulf %158, %148 : vector<1x16x16xf32>
    %160 = arith.addf %140, %159 : vector<1x16x16xf32>
    %c10 = arith.constant 10 : index
    %161 = memref.load %arg2[%c10] : memref<162xf32, #tpu.memory_space<smem>>
    %162 = vector.broadcast %161 : f32 to vector<1x16x16xf32>
    %163 = arith.mulf %162, %145 : vector<1x16x16xf32>
    %164 = arith.addf %152, %163 : vector<1x16x16xf32>
    %c64 = arith.constant 64 : index
    %165 = memref.load %arg2[%c64] : memref<162xf32, #tpu.memory_space<smem>>
    %166 = vector.broadcast %165 : f32 to vector<1x16x16xf32>
    %167 = arith.mulf %166, %145 : vector<1x16x16xf32>
    %168 = arith.addf %156, %167 : vector<1x16x16xf32>
    %c118 = arith.constant 118 : index
    %169 = memref.load %arg2[%c118] : memref<162xf32, #tpu.memory_space<smem>>
    %170 = vector.broadcast %169 : f32 to vector<1x16x16xf32>
    %171 = arith.mulf %170, %145 : vector<1x16x16xf32>
    %172 = arith.addf %160, %171 : vector<1x16x16xf32>
    %c15_i32_29 = arith.constant 15 : i32
    %173 = tpu.dynamic_rotate %145 by %c15_i32_29 dim 2 : vector<1x16x16xf32>, i32 -> vector<1x16x16xf32>
    %cst_30 = arith.constant 0.000000e+00 : f32
    %174 = vector.broadcast %cst_30 : f32 to vector<1x16x16xf32>
    %175 = arith.select %9, %173, %174 : vector<1x16x16xi1>, vector<1x16x16xf32>
    %c11 = arith.constant 11 : index
    %176 = memref.load %arg2[%c11] : memref<162xf32, #tpu.memory_space<smem>>
    %177 = vector.broadcast %176 : f32 to vector<1x16x16xf32>
    %178 = arith.mulf %177, %175 : vector<1x16x16xf32>
    %179 = arith.addf %164, %178 : vector<1x16x16xf32>
    %c65 = arith.constant 65 : index
    %180 = memref.load %arg2[%c65] : memref<162xf32, #tpu.memory_space<smem>>
    %181 = vector.broadcast %180 : f32 to vector<1x16x16xf32>
    %182 = arith.mulf %181, %175 : vector<1x16x16xf32>
    %183 = arith.addf %168, %182 : vector<1x16x16xf32>
    %c119 = arith.constant 119 : index
    %184 = memref.load %arg2[%c119] : memref<162xf32, #tpu.memory_space<smem>>
    %185 = vector.broadcast %184 : f32 to vector<1x16x16xf32>
    %186 = arith.mulf %185, %175 : vector<1x16x16xf32>
    %187 = arith.addf %172, %186 : vector<1x16x16xf32>
    %c1_i32_31 = arith.constant 1 : i32
    %188 = tpu.dynamic_rotate %142 by %c1_i32_31 dim 2 : vector<1x16x16xf32>, i32 -> vector<1x16x16xf32>
    %cst_32 = arith.constant 0.000000e+00 : f32
    %189 = vector.broadcast %cst_32 : f32 to vector<1x16x16xf32>
    %190 = arith.select %7, %188, %189 : vector<1x16x16xi1>, vector<1x16x16xf32>
    %c12 = arith.constant 12 : index
    %191 = memref.load %arg2[%c12] : memref<162xf32, #tpu.memory_space<smem>>
    %192 = vector.broadcast %191 : f32 to vector<1x16x16xf32>
    %193 = arith.mulf %192, %190 : vector<1x16x16xf32>
    %194 = arith.addf %179, %193 : vector<1x16x16xf32>
    %c66 = arith.constant 66 : index
    %195 = memref.load %arg2[%c66] : memref<162xf32, #tpu.memory_space<smem>>
    %196 = vector.broadcast %195 : f32 to vector<1x16x16xf32>
    %197 = arith.mulf %196, %190 : vector<1x16x16xf32>
    %198 = arith.addf %183, %197 : vector<1x16x16xf32>
    %c120 = arith.constant 120 : index
    %199 = memref.load %arg2[%c120] : memref<162xf32, #tpu.memory_space<smem>>
    %200 = vector.broadcast %199 : f32 to vector<1x16x16xf32>
    %201 = arith.mulf %200, %190 : vector<1x16x16xf32>
    %202 = arith.addf %187, %201 : vector<1x16x16xf32>
    %c13 = arith.constant 13 : index
    %203 = memref.load %arg2[%c13] : memref<162xf32, #tpu.memory_space<smem>>
    %204 = vector.broadcast %203 : f32 to vector<1x16x16xf32>
    %205 = arith.mulf %204, %142 : vector<1x16x16xf32>
    %206 = arith.addf %194, %205 : vector<1x16x16xf32>
    %c67 = arith.constant 67 : index
    %207 = memref.load %arg2[%c67] : memref<162xf32, #tpu.memory_space<smem>>
    %208 = vector.broadcast %207 : f32 to vector<1x16x16xf32>
    %209 = arith.mulf %208, %142 : vector<1x16x16xf32>
    %210 = arith.addf %198, %209 : vector<1x16x16xf32>
    %c121 = arith.constant 121 : index
    %211 = memref.load %arg2[%c121] : memref<162xf32, #tpu.memory_space<smem>>
    %212 = vector.broadcast %211 : f32 to vector<1x16x16xf32>
    %213 = arith.mulf %212, %142 : vector<1x16x16xf32>
    %214 = arith.addf %202, %213 : vector<1x16x16xf32>
    %c15_i32_33 = arith.constant 15 : i32
    %215 = tpu.dynamic_rotate %142 by %c15_i32_33 dim 2 : vector<1x16x16xf32>, i32 -> vector<1x16x16xf32>
    %cst_34 = arith.constant 0.000000e+00 : f32
    %216 = vector.broadcast %cst_34 : f32 to vector<1x16x16xf32>
    %217 = arith.select %9, %215, %216 : vector<1x16x16xi1>, vector<1x16x16xf32>
    %c14 = arith.constant 14 : index
    %218 = memref.load %arg2[%c14] : memref<162xf32, #tpu.memory_space<smem>>
    %219 = vector.broadcast %218 : f32 to vector<1x16x16xf32>
    %220 = arith.mulf %219, %217 : vector<1x16x16xf32>
    %221 = arith.addf %206, %220 : vector<1x16x16xf32>
    %c68 = arith.constant 68 : index
    %222 = memref.load %arg2[%c68] : memref<162xf32, #tpu.memory_space<smem>>
    %223 = vector.broadcast %222 : f32 to vector<1x16x16xf32>
    %224 = arith.mulf %223, %217 : vector<1x16x16xf32>
    %225 = arith.addf %210, %224 : vector<1x16x16xf32>
    %c122 = arith.constant 122 : index
    %226 = memref.load %arg2[%c122] : memref<162xf32, #tpu.memory_space<smem>>
    %227 = vector.broadcast %226 : f32 to vector<1x16x16xf32>
    %228 = arith.mulf %227, %217 : vector<1x16x16xf32>
    %229 = arith.addf %214, %228 : vector<1x16x16xf32>
    %c15_i32_35 = arith.constant 15 : i32
    %230 = tpu.dynamic_rotate %142 by %c15_i32_35 dim 1 : vector<1x16x16xf32>, i32 -> vector<1x16x16xf32>
    %cst_36 = arith.constant 0.000000e+00 : f32
    %231 = vector.broadcast %cst_36 : f32 to vector<1x16x16xf32>
    %232 = arith.select %5, %230, %231 : vector<1x16x16xi1>, vector<1x16x16xf32>
    %c1_i32_37 = arith.constant 1 : i32
    %233 = tpu.dynamic_rotate %232 by %c1_i32_37 dim 2 : vector<1x16x16xf32>, i32 -> vector<1x16x16xf32>
    %cst_38 = arith.constant 0.000000e+00 : f32
    %234 = vector.broadcast %cst_38 : f32 to vector<1x16x16xf32>
    %235 = arith.select %7, %233, %234 : vector<1x16x16xi1>, vector<1x16x16xf32>
    %c15 = arith.constant 15 : index
    %236 = memref.load %arg2[%c15] : memref<162xf32, #tpu.memory_space<smem>>
    %237 = vector.broadcast %236 : f32 to vector<1x16x16xf32>
    %238 = arith.mulf %237, %235 : vector<1x16x16xf32>
    %239 = arith.addf %221, %238 : vector<1x16x16xf32>
    %c69 = arith.constant 69 : index
    %240 = memref.load %arg2[%c69] : memref<162xf32, #tpu.memory_space<smem>>
    %241 = vector.broadcast %240 : f32 to vector<1x16x16xf32>
    %242 = arith.mulf %241, %235 : vector<1x16x16xf32>
    %243 = arith.addf %225, %242 : vector<1x16x16xf32>
    %c123 = arith.constant 123 : index
    %244 = memref.load %arg2[%c123] : memref<162xf32, #tpu.memory_space<smem>>
    %245 = vector.broadcast %244 : f32 to vector<1x16x16xf32>
    %246 = arith.mulf %245, %235 : vector<1x16x16xf32>
    %247 = arith.addf %229, %246 : vector<1x16x16xf32>
    %c16 = arith.constant 16 : index
    %248 = memref.load %arg2[%c16] : memref<162xf32, #tpu.memory_space<smem>>
    %249 = vector.broadcast %248 : f32 to vector<1x16x16xf32>
    %250 = arith.mulf %249, %232 : vector<1x16x16xf32>
    %251 = arith.addf %239, %250 : vector<1x16x16xf32>
    %c70 = arith.constant 70 : index
    %252 = memref.load %arg2[%c70] : memref<162xf32, #tpu.memory_space<smem>>
    %253 = vector.broadcast %252 : f32 to vector<1x16x16xf32>
    %254 = arith.mulf %253, %232 : vector<1x16x16xf32>
    %255 = arith.addf %243, %254 : vector<1x16x16xf32>
    %c124 = arith.constant 124 : index
    %256 = memref.load %arg2[%c124] : memref<162xf32, #tpu.memory_space<smem>>
    %257 = vector.broadcast %256 : f32 to vector<1x16x16xf32>
    %258 = arith.mulf %257, %232 : vector<1x16x16xf32>
    %259 = arith.addf %247, %258 : vector<1x16x16xf32>
    %c15_i32_39 = arith.constant 15 : i32
    %260 = tpu.dynamic_rotate %232 by %c15_i32_39 dim 2 : vector<1x16x16xf32>, i32 -> vector<1x16x16xf32>
    %cst_40 = arith.constant 0.000000e+00 : f32
    %261 = vector.broadcast %cst_40 : f32 to vector<1x16x16xf32>
    %262 = arith.select %9, %260, %261 : vector<1x16x16xi1>, vector<1x16x16xf32>
    %c17 = arith.constant 17 : index
    %263 = memref.load %arg2[%c17] : memref<162xf32, #tpu.memory_space<smem>>
    %264 = vector.broadcast %263 : f32 to vector<1x16x16xf32>
    %265 = arith.mulf %264, %262 : vector<1x16x16xf32>
    %266 = arith.addf %251, %265 : vector<1x16x16xf32>
    %c71 = arith.constant 71 : index
    %267 = memref.load %arg2[%c71] : memref<162xf32, #tpu.memory_space<smem>>
    %268 = vector.broadcast %267 : f32 to vector<1x16x16xf32>
    %269 = arith.mulf %268, %262 : vector<1x16x16xf32>
    %270 = arith.addf %255, %269 : vector<1x16x16xf32>
    %c125 = arith.constant 125 : index
    %271 = memref.load %arg2[%c125] : memref<162xf32, #tpu.memory_space<smem>>
    %272 = vector.broadcast %271 : f32 to vector<1x16x16xf32>
    %273 = arith.mulf %272, %262 : vector<1x16x16xf32>
    %274 = arith.addf %259, %273 : vector<1x16x16xf32>
    %c0_41 = arith.constant 0 : index
    %c2_42 = arith.constant 2 : index
    %c0_43 = arith.constant 0 : index
    %c0_44 = arith.constant 0 : index
    %275 = vector.load %arg1[%c0_41, %c2_42, %c0_43, %c0_44] : memref<1x6x16x16xf32, #tpu.memory_space<vmem>>, vector<1x1x16x16xf32>
    %276 = vector.shape_cast %275 : vector<1x1x16x16xf32> to vector<1x16x16xf32>
    %c1_i32_45 = arith.constant 1 : i32
    %277 = tpu.dynamic_rotate %276 by %c1_i32_45 dim 1 : vector<1x16x16xf32>, i32 -> vector<1x16x16xf32>
    %cst_46 = arith.constant 0.000000e+00 : f32
    %278 = vector.broadcast %cst_46 : f32 to vector<1x16x16xf32>
    %279 = arith.select %3, %277, %278 : vector<1x16x16xi1>, vector<1x16x16xf32>
    %c1_i32_47 = arith.constant 1 : i32
    %280 = tpu.dynamic_rotate %279 by %c1_i32_47 dim 2 : vector<1x16x16xf32>, i32 -> vector<1x16x16xf32>
    %cst_48 = arith.constant 0.000000e+00 : f32
    %281 = vector.broadcast %cst_48 : f32 to vector<1x16x16xf32>
    %282 = arith.select %7, %280, %281 : vector<1x16x16xi1>, vector<1x16x16xf32>
    %c18 = arith.constant 18 : index
    %283 = memref.load %arg2[%c18] : memref<162xf32, #tpu.memory_space<smem>>
    %284 = vector.broadcast %283 : f32 to vector<1x16x16xf32>
    %285 = arith.mulf %284, %282 : vector<1x16x16xf32>
    %286 = arith.addf %266, %285 : vector<1x16x16xf32>
    %c72 = arith.constant 72 : index
    %287 = memref.load %arg2[%c72] : memref<162xf32, #tpu.memory_space<smem>>
    %288 = vector.broadcast %287 : f32 to vector<1x16x16xf32>
    %289 = arith.mulf %288, %282 : vector<1x16x16xf32>
    %290 = arith.addf %270, %289 : vector<1x16x16xf32>
    %c126 = arith.constant 126 : index
    %291 = memref.load %arg2[%c126] : memref<162xf32, #tpu.memory_space<smem>>
    %292 = vector.broadcast %291 : f32 to vector<1x16x16xf32>
    %293 = arith.mulf %292, %282 : vector<1x16x16xf32>
    %294 = arith.addf %274, %293 : vector<1x16x16xf32>
    %c19 = arith.constant 19 : index
    %295 = memref.load %arg2[%c19] : memref<162xf32, #tpu.memory_space<smem>>
    %296 = vector.broadcast %295 : f32 to vector<1x16x16xf32>
    %297 = arith.mulf %296, %279 : vector<1x16x16xf32>
    %298 = arith.addf %286, %297 : vector<1x16x16xf32>
    %c73 = arith.constant 73 : index
    %299 = memref.load %arg2[%c73] : memref<162xf32, #tpu.memory_space<smem>>
    %300 = vector.broadcast %299 : f32 to vector<1x16x16xf32>
    %301 = arith.mulf %300, %279 : vector<1x16x16xf32>
    %302 = arith.addf %290, %301 : vector<1x16x16xf32>
    %c127 = arith.constant 127 : index
    %303 = memref.load %arg2[%c127] : memref<162xf32, #tpu.memory_space<smem>>
    %304 = vector.broadcast %303 : f32 to vector<1x16x16xf32>
    %305 = arith.mulf %304, %279 : vector<1x16x16xf32>
    %306 = arith.addf %294, %305 : vector<1x16x16xf32>
    %c15_i32_49 = arith.constant 15 : i32
    %307 = tpu.dynamic_rotate %279 by %c15_i32_49 dim 2 : vector<1x16x16xf32>, i32 -> vector<1x16x16xf32>
    %cst_50 = arith.constant 0.000000e+00 : f32
    %308 = vector.broadcast %cst_50 : f32 to vector<1x16x16xf32>
    %309 = arith.select %9, %307, %308 : vector<1x16x16xi1>, vector<1x16x16xf32>
    %c20 = arith.constant 20 : index
    %310 = memref.load %arg2[%c20] : memref<162xf32, #tpu.memory_space<smem>>
    %311 = vector.broadcast %310 : f32 to vector<1x16x16xf32>
    %312 = arith.mulf %311, %309 : vector<1x16x16xf32>
    %313 = arith.addf %298, %312 : vector<1x16x16xf32>
    %c74 = arith.constant 74 : index
    %314 = memref.load %arg2[%c74] : memref<162xf32, #tpu.memory_space<smem>>
    %315 = vector.broadcast %314 : f32 to vector<1x16x16xf32>
    %316 = arith.mulf %315, %309 : vector<1x16x16xf32>
    %317 = arith.addf %302, %316 : vector<1x16x16xf32>
    %c128 = arith.constant 128 : index
    %318 = memref.load %arg2[%c128] : memref<162xf32, #tpu.memory_space<smem>>
    %319 = vector.broadcast %318 : f32 to vector<1x16x16xf32>
    %320 = arith.mulf %319, %309 : vector<1x16x16xf32>
    %321 = arith.addf %306, %320 : vector<1x16x16xf32>
    %c1_i32_51 = arith.constant 1 : i32
    %322 = tpu.dynamic_rotate %276 by %c1_i32_51 dim 2 : vector<1x16x16xf32>, i32 -> vector<1x16x16xf32>
    %cst_52 = arith.constant 0.000000e+00 : f32
    %323 = vector.broadcast %cst_52 : f32 to vector<1x16x16xf32>
    %324 = arith.select %7, %322, %323 : vector<1x16x16xi1>, vector<1x16x16xf32>
    %c21 = arith.constant 21 : index
    %325 = memref.load %arg2[%c21] : memref<162xf32, #tpu.memory_space<smem>>
    %326 = vector.broadcast %325 : f32 to vector<1x16x16xf32>
    %327 = arith.mulf %326, %324 : vector<1x16x16xf32>
    %328 = arith.addf %313, %327 : vector<1x16x16xf32>
    %c75 = arith.constant 75 : index
    %329 = memref.load %arg2[%c75] : memref<162xf32, #tpu.memory_space<smem>>
    %330 = vector.broadcast %329 : f32 to vector<1x16x16xf32>
    %331 = arith.mulf %330, %324 : vector<1x16x16xf32>
    %332 = arith.addf %317, %331 : vector<1x16x16xf32>
    %c129 = arith.constant 129 : index
    %333 = memref.load %arg2[%c129] : memref<162xf32, #tpu.memory_space<smem>>
    %334 = vector.broadcast %333 : f32 to vector<1x16x16xf32>
    %335 = arith.mulf %334, %324 : vector<1x16x16xf32>
    %336 = arith.addf %321, %335 : vector<1x16x16xf32>
    %c22 = arith.constant 22 : index
    %337 = memref.load %arg2[%c22] : memref<162xf32, #tpu.memory_space<smem>>
    %338 = vector.broadcast %337 : f32 to vector<1x16x16xf32>
    %339 = arith.mulf %338, %276 : vector<1x16x16xf32>
    %340 = arith.addf %328, %339 : vector<1x16x16xf32>
    %c76 = arith.constant 76 : index
    %341 = memref.load %arg2[%c76] : memref<162xf32, #tpu.memory_space<smem>>
    %342 = vector.broadcast %341 : f32 to vector<1x16x16xf32>
    %343 = arith.mulf %342, %276 : vector<1x16x16xf32>
    %344 = arith.addf %332, %343 : vector<1x16x16xf32>
    %c130 = arith.constant 130 : index
    %345 = memref.load %arg2[%c130] : memref<162xf32, #tpu.memory_space<smem>>
    %346 = vector.broadcast %345 : f32 to vector<1x16x16xf32>
    %347 = arith.mulf %346, %276 : vector<1x16x16xf32>
    %348 = arith.addf %336, %347 : vector<1x16x16xf32>
    %c15_i32_53 = arith.constant 15 : i32
    %349 = tpu.dynamic_rotate %276 by %c15_i32_53 dim 2 : vector<1x16x16xf32>, i32 -> vector<1x16x16xf32>
    %cst_54 = arith.constant 0.000000e+00 : f32
    %350 = vector.broadcast %cst_54 : f32 to vector<1x16x16xf32>
    %351 = arith.select %9, %349, %350 : vector<1x16x16xi1>, vector<1x16x16xf32>
    %c23 = arith.constant 23 : index
    %352 = memref.load %arg2[%c23] : memref<162xf32, #tpu.memory_space<smem>>
    %353 = vector.broadcast %352 : f32 to vector<1x16x16xf32>
    %354 = arith.mulf %353, %351 : vector<1x16x16xf32>
    %355 = arith.addf %340, %354 : vector<1x16x16xf32>
    %c77 = arith.constant 77 : index
    %356 = memref.load %arg2[%c77] : memref<162xf32, #tpu.memory_space<smem>>
    %357 = vector.broadcast %356 : f32 to vector<1x16x16xf32>
    %358 = arith.mulf %357, %351 : vector<1x16x16xf32>
    %359 = arith.addf %344, %358 : vector<1x16x16xf32>
    %c131 = arith.constant 131 : index
    %360 = memref.load %arg2[%c131] : memref<162xf32, #tpu.memory_space<smem>>
    %361 = vector.broadcast %360 : f32 to vector<1x16x16xf32>
    %362 = arith.mulf %361, %351 : vector<1x16x16xf32>
    %363 = arith.addf %348, %362 : vector<1x16x16xf32>
    %c15_i32_55 = arith.constant 15 : i32
    %364 = tpu.dynamic_rotate %276 by %c15_i32_55 dim 1 : vector<1x16x16xf32>, i32 -> vector<1x16x16xf32>
    %cst_56 = arith.constant 0.000000e+00 : f32
    %365 = vector.broadcast %cst_56 : f32 to vector<1x16x16xf32>
    %366 = arith.select %5, %364, %365 : vector<1x16x16xi1>, vector<1x16x16xf32>
    %c1_i32_57 = arith.constant 1 : i32
    %367 = tpu.dynamic_rotate %366 by %c1_i32_57 dim 2 : vector<1x16x16xf32>, i32 -> vector<1x16x16xf32>
    %cst_58 = arith.constant 0.000000e+00 : f32
    %368 = vector.broadcast %cst_58 : f32 to vector<1x16x16xf32>
    %369 = arith.select %7, %367, %368 : vector<1x16x16xi1>, vector<1x16x16xf32>
    %c24 = arith.constant 24 : index
    %370 = memref.load %arg2[%c24] : memref<162xf32, #tpu.memory_space<smem>>
    %371 = vector.broadcast %370 : f32 to vector<1x16x16xf32>
    %372 = arith.mulf %371, %369 : vector<1x16x16xf32>
    %373 = arith.addf %355, %372 : vector<1x16x16xf32>
    %c78 = arith.constant 78 : index
    %374 = memref.load %arg2[%c78] : memref<162xf32, #tpu.memory_space<smem>>
    %375 = vector.broadcast %374 : f32 to vector<1x16x16xf32>
    %376 = arith.mulf %375, %369 : vector<1x16x16xf32>
    %377 = arith.addf %359, %376 : vector<1x16x16xf32>
    %c132 = arith.constant 132 : index
    %378 = memref.load %arg2[%c132] : memref<162xf32, #tpu.memory_space<smem>>
    %379 = vector.broadcast %378 : f32 to vector<1x16x16xf32>
    %380 = arith.mulf %379, %369 : vector<1x16x16xf32>
    %381 = arith.addf %363, %380 : vector<1x16x16xf32>
    %c25 = arith.constant 25 : index
    %382 = memref.load %arg2[%c25] : memref<162xf32, #tpu.memory_space<smem>>
    %383 = vector.broadcast %382 : f32 to vector<1x16x16xf32>
    %384 = arith.mulf %383, %366 : vector<1x16x16xf32>
    %385 = arith.addf %373, %384 : vector<1x16x16xf32>
    %c79 = arith.constant 79 : index
    %386 = memref.load %arg2[%c79] : memref<162xf32, #tpu.memory_space<smem>>
    %387 = vector.broadcast %386 : f32 to vector<1x16x16xf32>
    %388 = arith.mulf %387, %366 : vector<1x16x16xf32>
    %389 = arith.addf %377, %388 : vector<1x16x16xf32>
    %c133 = arith.constant 133 : index
    %390 = memref.load %arg2[%c133] : memref<162xf32, #tpu.memory_space<smem>>
    %391 = vector.broadcast %390 : f32 to vector<1x16x16xf32>
    %392 = arith.mulf %391, %366 : vector<1x16x16xf32>
    %393 = arith.addf %381, %392 : vector<1x16x16xf32>
    %c15_i32_59 = arith.constant 15 : i32
    %394 = tpu.dynamic_rotate %366 by %c15_i32_59 dim 2 : vector<1x16x16xf32>, i32 -> vector<1x16x16xf32>
    %cst_60 = arith.constant 0.000000e+00 : f32
    %395 = vector.broadcast %cst_60 : f32 to vector<1x16x16xf32>
    %396 = arith.select %9, %394, %395 : vector<1x16x16xi1>, vector<1x16x16xf32>
    %c26 = arith.constant 26 : index
    %397 = memref.load %arg2[%c26] : memref<162xf32, #tpu.memory_space<smem>>
    %398 = vector.broadcast %397 : f32 to vector<1x16x16xf32>
    %399 = arith.mulf %398, %396 : vector<1x16x16xf32>
    %400 = arith.addf %385, %399 : vector<1x16x16xf32>
    %c80 = arith.constant 80 : index
    %401 = memref.load %arg2[%c80] : memref<162xf32, #tpu.memory_space<smem>>
    %402 = vector.broadcast %401 : f32 to vector<1x16x16xf32>
    %403 = arith.mulf %402, %396 : vector<1x16x16xf32>
    %404 = arith.addf %389, %403 : vector<1x16x16xf32>
    %c134 = arith.constant 134 : index
    %405 = memref.load %arg2[%c134] : memref<162xf32, #tpu.memory_space<smem>>
    %406 = vector.broadcast %405 : f32 to vector<1x16x16xf32>
    %407 = arith.mulf %406, %396 : vector<1x16x16xf32>
    %408 = arith.addf %393, %407 : vector<1x16x16xf32>
    %c0_61 = arith.constant 0 : index
    %c3_62 = arith.constant 3 : index
    %c0_63 = arith.constant 0 : index
    %c0_64 = arith.constant 0 : index
    %409 = vector.load %arg1[%c0_61, %c3_62, %c0_63, %c0_64] : memref<1x6x16x16xf32, #tpu.memory_space<vmem>>, vector<1x1x16x16xf32>
    %410 = vector.shape_cast %409 : vector<1x1x16x16xf32> to vector<1x16x16xf32>
    %c1_i32_65 = arith.constant 1 : i32
    %411 = tpu.dynamic_rotate %410 by %c1_i32_65 dim 1 : vector<1x16x16xf32>, i32 -> vector<1x16x16xf32>
    %cst_66 = arith.constant 0.000000e+00 : f32
    %412 = vector.broadcast %cst_66 : f32 to vector<1x16x16xf32>
    %413 = arith.select %3, %411, %412 : vector<1x16x16xi1>, vector<1x16x16xf32>
    %c1_i32_67 = arith.constant 1 : i32
    %414 = tpu.dynamic_rotate %413 by %c1_i32_67 dim 2 : vector<1x16x16xf32>, i32 -> vector<1x16x16xf32>
    %cst_68 = arith.constant 0.000000e+00 : f32
    %415 = vector.broadcast %cst_68 : f32 to vector<1x16x16xf32>
    %416 = arith.select %7, %414, %415 : vector<1x16x16xi1>, vector<1x16x16xf32>
    %c27 = arith.constant 27 : index
    %417 = memref.load %arg2[%c27] : memref<162xf32, #tpu.memory_space<smem>>
    %418 = vector.broadcast %417 : f32 to vector<1x16x16xf32>
    %419 = arith.mulf %418, %416 : vector<1x16x16xf32>
    %420 = arith.addf %400, %419 : vector<1x16x16xf32>
    %c81 = arith.constant 81 : index
    %421 = memref.load %arg2[%c81] : memref<162xf32, #tpu.memory_space<smem>>
    %422 = vector.broadcast %421 : f32 to vector<1x16x16xf32>
    %423 = arith.mulf %422, %416 : vector<1x16x16xf32>
    %424 = arith.addf %404, %423 : vector<1x16x16xf32>
    %c135 = arith.constant 135 : index
    %425 = memref.load %arg2[%c135] : memref<162xf32, #tpu.memory_space<smem>>
    %426 = vector.broadcast %425 : f32 to vector<1x16x16xf32>
    %427 = arith.mulf %426, %416 : vector<1x16x16xf32>
    %428 = arith.addf %408, %427 : vector<1x16x16xf32>
    %c28 = arith.constant 28 : index
    %429 = memref.load %arg2[%c28] : memref<162xf32, #tpu.memory_space<smem>>
    %430 = vector.broadcast %429 : f32 to vector<1x16x16xf32>
    %431 = arith.mulf %430, %413 : vector<1x16x16xf32>
    %432 = arith.addf %420, %431 : vector<1x16x16xf32>
    %c82 = arith.constant 82 : index
    %433 = memref.load %arg2[%c82] : memref<162xf32, #tpu.memory_space<smem>>
    %434 = vector.broadcast %433 : f32 to vector<1x16x16xf32>
    %435 = arith.mulf %434, %413 : vector<1x16x16xf32>
    %436 = arith.addf %424, %435 : vector<1x16x16xf32>
    %c136 = arith.constant 136 : index
    %437 = memref.load %arg2[%c136] : memref<162xf32, #tpu.memory_space<smem>>
    %438 = vector.broadcast %437 : f32 to vector<1x16x16xf32>
    %439 = arith.mulf %438, %413 : vector<1x16x16xf32>
    %440 = arith.addf %428, %439 : vector<1x16x16xf32>
    %c15_i32_69 = arith.constant 15 : i32
    %441 = tpu.dynamic_rotate %413 by %c15_i32_69 dim 2 : vector<1x16x16xf32>, i32 -> vector<1x16x16xf32>
    %cst_70 = arith.constant 0.000000e+00 : f32
    %442 = vector.broadcast %cst_70 : f32 to vector<1x16x16xf32>
    %443 = arith.select %9, %441, %442 : vector<1x16x16xi1>, vector<1x16x16xf32>
    %c29 = arith.constant 29 : index
    %444 = memref.load %arg2[%c29] : memref<162xf32, #tpu.memory_space<smem>>
    %445 = vector.broadcast %444 : f32 to vector<1x16x16xf32>
    %446 = arith.mulf %445, %443 : vector<1x16x16xf32>
    %447 = arith.addf %432, %446 : vector<1x16x16xf32>
    %c83 = arith.constant 83 : index
    %448 = memref.load %arg2[%c83] : memref<162xf32, #tpu.memory_space<smem>>
    %449 = vector.broadcast %448 : f32 to vector<1x16x16xf32>
    %450 = arith.mulf %449, %443 : vector<1x16x16xf32>
    %451 = arith.addf %436, %450 : vector<1x16x16xf32>
    %c137 = arith.constant 137 : index
    %452 = memref.load %arg2[%c137] : memref<162xf32, #tpu.memory_space<smem>>
    %453 = vector.broadcast %452 : f32 to vector<1x16x16xf32>
    %454 = arith.mulf %453, %443 : vector<1x16x16xf32>
    %455 = arith.addf %440, %454 : vector<1x16x16xf32>
    %c1_i32_71 = arith.constant 1 : i32
    %456 = tpu.dynamic_rotate %410 by %c1_i32_71 dim 2 : vector<1x16x16xf32>, i32 -> vector<1x16x16xf32>
    %cst_72 = arith.constant 0.000000e+00 : f32
    %457 = vector.broadcast %cst_72 : f32 to vector<1x16x16xf32>
    %458 = arith.select %7, %456, %457 : vector<1x16x16xi1>, vector<1x16x16xf32>
    %c30 = arith.constant 30 : index
    %459 = memref.load %arg2[%c30] : memref<162xf32, #tpu.memory_space<smem>>
    %460 = vector.broadcast %459 : f32 to vector<1x16x16xf32>
    %461 = arith.mulf %460, %458 : vector<1x16x16xf32>
    %462 = arith.addf %447, %461 : vector<1x16x16xf32>
    %c84 = arith.constant 84 : index
    %463 = memref.load %arg2[%c84] : memref<162xf32, #tpu.memory_space<smem>>
    %464 = vector.broadcast %463 : f32 to vector<1x16x16xf32>
    %465 = arith.mulf %464, %458 : vector<1x16x16xf32>
    %466 = arith.addf %451, %465 : vector<1x16x16xf32>
    %c138 = arith.constant 138 : index
    %467 = memref.load %arg2[%c138] : memref<162xf32, #tpu.memory_space<smem>>
    %468 = vector.broadcast %467 : f32 to vector<1x16x16xf32>
    %469 = arith.mulf %468, %458 : vector<1x16x16xf32>
    %470 = arith.addf %455, %469 : vector<1x16x16xf32>
    %c31 = arith.constant 31 : index
    %471 = memref.load %arg2[%c31] : memref<162xf32, #tpu.memory_space<smem>>
    %472 = vector.broadcast %471 : f32 to vector<1x16x16xf32>
    %473 = arith.mulf %472, %410 : vector<1x16x16xf32>
    %474 = arith.addf %462, %473 : vector<1x16x16xf32>
    %c85 = arith.constant 85 : index
    %475 = memref.load %arg2[%c85] : memref<162xf32, #tpu.memory_space<smem>>
    %476 = vector.broadcast %475 : f32 to vector<1x16x16xf32>
    %477 = arith.mulf %476, %410 : vector<1x16x16xf32>
    %478 = arith.addf %466, %477 : vector<1x16x16xf32>
    %c139 = arith.constant 139 : index
    %479 = memref.load %arg2[%c139] : memref<162xf32, #tpu.memory_space<smem>>
    %480 = vector.broadcast %479 : f32 to vector<1x16x16xf32>
    %481 = arith.mulf %480, %410 : vector<1x16x16xf32>
    %482 = arith.addf %470, %481 : vector<1x16x16xf32>
    %c15_i32_73 = arith.constant 15 : i32
    %483 = tpu.dynamic_rotate %410 by %c15_i32_73 dim 2 : vector<1x16x16xf32>, i32 -> vector<1x16x16xf32>
    %cst_74 = arith.constant 0.000000e+00 : f32
    %484 = vector.broadcast %cst_74 : f32 to vector<1x16x16xf32>
    %485 = arith.select %9, %483, %484 : vector<1x16x16xi1>, vector<1x16x16xf32>
    %c32 = arith.constant 32 : index
    %486 = memref.load %arg2[%c32] : memref<162xf32, #tpu.memory_space<smem>>
    %487 = vector.broadcast %486 : f32 to vector<1x16x16xf32>
    %488 = arith.mulf %487, %485 : vector<1x16x16xf32>
    %489 = arith.addf %474, %488 : vector<1x16x16xf32>
    %c86 = arith.constant 86 : index
    %490 = memref.load %arg2[%c86] : memref<162xf32, #tpu.memory_space<smem>>
    %491 = vector.broadcast %490 : f32 to vector<1x16x16xf32>
    %492 = arith.mulf %491, %485 : vector<1x16x16xf32>
    %493 = arith.addf %478, %492 : vector<1x16x16xf32>
    %c140 = arith.constant 140 : index
    %494 = memref.load %arg2[%c140] : memref<162xf32, #tpu.memory_space<smem>>
    %495 = vector.broadcast %494 : f32 to vector<1x16x16xf32>
    %496 = arith.mulf %495, %485 : vector<1x16x16xf32>
    %497 = arith.addf %482, %496 : vector<1x16x16xf32>
    %c15_i32_75 = arith.constant 15 : i32
    %498 = tpu.dynamic_rotate %410 by %c15_i32_75 dim 1 : vector<1x16x16xf32>, i32 -> vector<1x16x16xf32>
    %cst_76 = arith.constant 0.000000e+00 : f32
    %499 = vector.broadcast %cst_76 : f32 to vector<1x16x16xf32>
    %500 = arith.select %5, %498, %499 : vector<1x16x16xi1>, vector<1x16x16xf32>
    %c1_i32_77 = arith.constant 1 : i32
    %501 = tpu.dynamic_rotate %500 by %c1_i32_77 dim 2 : vector<1x16x16xf32>, i32 -> vector<1x16x16xf32>
    %cst_78 = arith.constant 0.000000e+00 : f32
    %502 = vector.broadcast %cst_78 : f32 to vector<1x16x16xf32>
    %503 = arith.select %7, %501, %502 : vector<1x16x16xi1>, vector<1x16x16xf32>
    %c33 = arith.constant 33 : index
    %504 = memref.load %arg2[%c33] : memref<162xf32, #tpu.memory_space<smem>>
    %505 = vector.broadcast %504 : f32 to vector<1x16x16xf32>
    %506 = arith.mulf %505, %503 : vector<1x16x16xf32>
    %507 = arith.addf %489, %506 : vector<1x16x16xf32>
    %c87 = arith.constant 87 : index
    %508 = memref.load %arg2[%c87] : memref<162xf32, #tpu.memory_space<smem>>
    %509 = vector.broadcast %508 : f32 to vector<1x16x16xf32>
    %510 = arith.mulf %509, %503 : vector<1x16x16xf32>
    %511 = arith.addf %493, %510 : vector<1x16x16xf32>
    %c141 = arith.constant 141 : index
    %512 = memref.load %arg2[%c141] : memref<162xf32, #tpu.memory_space<smem>>
    %513 = vector.broadcast %512 : f32 to vector<1x16x16xf32>
    %514 = arith.mulf %513, %503 : vector<1x16x16xf32>
    %515 = arith.addf %497, %514 : vector<1x16x16xf32>
    %c34 = arith.constant 34 : index
    %516 = memref.load %arg2[%c34] : memref<162xf32, #tpu.memory_space<smem>>
    %517 = vector.broadcast %516 : f32 to vector<1x16x16xf32>
    %518 = arith.mulf %517, %500 : vector<1x16x16xf32>
    %519 = arith.addf %507, %518 : vector<1x16x16xf32>
    %c88 = arith.constant 88 : index
    %520 = memref.load %arg2[%c88] : memref<162xf32, #tpu.memory_space<smem>>
    %521 = vector.broadcast %520 : f32 to vector<1x16x16xf32>
    %522 = arith.mulf %521, %500 : vector<1x16x16xf32>
    %523 = arith.addf %511, %522 : vector<1x16x16xf32>
    %c142 = arith.constant 142 : index
    %524 = memref.load %arg2[%c142] : memref<162xf32, #tpu.memory_space<smem>>
    %525 = vector.broadcast %524 : f32 to vector<1x16x16xf32>
    %526 = arith.mulf %525, %500 : vector<1x16x16xf32>
    %527 = arith.addf %515, %526 : vector<1x16x16xf32>
    %c15_i32_79 = arith.constant 15 : i32
    %528 = tpu.dynamic_rotate %500 by %c15_i32_79 dim 2 : vector<1x16x16xf32>, i32 -> vector<1x16x16xf32>
    %cst_80 = arith.constant 0.000000e+00 : f32
    %529 = vector.broadcast %cst_80 : f32 to vector<1x16x16xf32>
    %530 = arith.select %9, %528, %529 : vector<1x16x16xi1>, vector<1x16x16xf32>
    %c35 = arith.constant 35 : index
    %531 = memref.load %arg2[%c35] : memref<162xf32, #tpu.memory_space<smem>>
    %532 = vector.broadcast %531 : f32 to vector<1x16x16xf32>
    %533 = arith.mulf %532, %530 : vector<1x16x16xf32>
    %534 = arith.addf %519, %533 : vector<1x16x16xf32>
    %c89 = arith.constant 89 : index
    %535 = memref.load %arg2[%c89] : memref<162xf32, #tpu.memory_space<smem>>
    %536 = vector.broadcast %535 : f32 to vector<1x16x16xf32>
    %537 = arith.mulf %536, %530 : vector<1x16x16xf32>
    %538 = arith.addf %523, %537 : vector<1x16x16xf32>
    %c143 = arith.constant 143 : index
    %539 = memref.load %arg2[%c143] : memref<162xf32, #tpu.memory_space<smem>>
    %540 = vector.broadcast %539 : f32 to vector<1x16x16xf32>
    %541 = arith.mulf %540, %530 : vector<1x16x16xf32>
    %542 = arith.addf %527, %541 : vector<1x16x16xf32>
    %c0_81 = arith.constant 0 : index
    %c4_82 = arith.constant 4 : index
    %c0_83 = arith.constant 0 : index
    %c0_84 = arith.constant 0 : index
    %543 = vector.load %arg1[%c0_81, %c4_82, %c0_83, %c0_84] : memref<1x6x16x16xf32, #tpu.memory_space<vmem>>, vector<1x1x16x16xf32>
    %544 = vector.shape_cast %543 : vector<1x1x16x16xf32> to vector<1x16x16xf32>
    %c1_i32_85 = arith.constant 1 : i32
    %545 = tpu.dynamic_rotate %544 by %c1_i32_85 dim 1 : vector<1x16x16xf32>, i32 -> vector<1x16x16xf32>
    %cst_86 = arith.constant 0.000000e+00 : f32
    %546 = vector.broadcast %cst_86 : f32 to vector<1x16x16xf32>
    %547 = arith.select %3, %545, %546 : vector<1x16x16xi1>, vector<1x16x16xf32>
    %c1_i32_87 = arith.constant 1 : i32
    %548 = tpu.dynamic_rotate %547 by %c1_i32_87 dim 2 : vector<1x16x16xf32>, i32 -> vector<1x16x16xf32>
    %cst_88 = arith.constant 0.000000e+00 : f32
    %549 = vector.broadcast %cst_88 : f32 to vector<1x16x16xf32>
    %550 = arith.select %7, %548, %549 : vector<1x16x16xi1>, vector<1x16x16xf32>
    %c36 = arith.constant 36 : index
    %551 = memref.load %arg2[%c36] : memref<162xf32, #tpu.memory_space<smem>>
    %552 = vector.broadcast %551 : f32 to vector<1x16x16xf32>
    %553 = arith.mulf %552, %550 : vector<1x16x16xf32>
    %554 = arith.addf %534, %553 : vector<1x16x16xf32>
    %c90 = arith.constant 90 : index
    %555 = memref.load %arg2[%c90] : memref<162xf32, #tpu.memory_space<smem>>
    %556 = vector.broadcast %555 : f32 to vector<1x16x16xf32>
    %557 = arith.mulf %556, %550 : vector<1x16x16xf32>
    %558 = arith.addf %538, %557 : vector<1x16x16xf32>
    %c144 = arith.constant 144 : index
    %559 = memref.load %arg2[%c144] : memref<162xf32, #tpu.memory_space<smem>>
    %560 = vector.broadcast %559 : f32 to vector<1x16x16xf32>
    %561 = arith.mulf %560, %550 : vector<1x16x16xf32>
    %562 = arith.addf %542, %561 : vector<1x16x16xf32>
    %c37 = arith.constant 37 : index
    %563 = memref.load %arg2[%c37] : memref<162xf32, #tpu.memory_space<smem>>
    %564 = vector.broadcast %563 : f32 to vector<1x16x16xf32>
    %565 = arith.mulf %564, %547 : vector<1x16x16xf32>
    %566 = arith.addf %554, %565 : vector<1x16x16xf32>
    %c91 = arith.constant 91 : index
    %567 = memref.load %arg2[%c91] : memref<162xf32, #tpu.memory_space<smem>>
    %568 = vector.broadcast %567 : f32 to vector<1x16x16xf32>
    %569 = arith.mulf %568, %547 : vector<1x16x16xf32>
    %570 = arith.addf %558, %569 : vector<1x16x16xf32>
    %c145 = arith.constant 145 : index
    %571 = memref.load %arg2[%c145] : memref<162xf32, #tpu.memory_space<smem>>
    %572 = vector.broadcast %571 : f32 to vector<1x16x16xf32>
    %573 = arith.mulf %572, %547 : vector<1x16x16xf32>
    %574 = arith.addf %562, %573 : vector<1x16x16xf32>
    %c15_i32_89 = arith.constant 15 : i32
    %575 = tpu.dynamic_rotate %547 by %c15_i32_89 dim 2 : vector<1x16x16xf32>, i32 -> vector<1x16x16xf32>
    %cst_90 = arith.constant 0.000000e+00 : f32
    %576 = vector.broadcast %cst_90 : f32 to vector<1x16x16xf32>
    %577 = arith.select %9, %575, %576 : vector<1x16x16xi1>, vector<1x16x16xf32>
    %c38 = arith.constant 38 : index
    %578 = memref.load %arg2[%c38] : memref<162xf32, #tpu.memory_space<smem>>
    %579 = vector.broadcast %578 : f32 to vector<1x16x16xf32>
    %580 = arith.mulf %579, %577 : vector<1x16x16xf32>
    %581 = arith.addf %566, %580 : vector<1x16x16xf32>
    %c92 = arith.constant 92 : index
    %582 = memref.load %arg2[%c92] : memref<162xf32, #tpu.memory_space<smem>>
    %583 = vector.broadcast %582 : f32 to vector<1x16x16xf32>
    %584 = arith.mulf %583, %577 : vector<1x16x16xf32>
    %585 = arith.addf %570, %584 : vector<1x16x16xf32>
    %c146 = arith.constant 146 : index
    %586 = memref.load %arg2[%c146] : memref<162xf32, #tpu.memory_space<smem>>
    %587 = vector.broadcast %586 : f32 to vector<1x16x16xf32>
    %588 = arith.mulf %587, %577 : vector<1x16x16xf32>
    %589 = arith.addf %574, %588 : vector<1x16x16xf32>
    %c1_i32_91 = arith.constant 1 : i32
    %590 = tpu.dynamic_rotate %544 by %c1_i32_91 dim 2 : vector<1x16x16xf32>, i32 -> vector<1x16x16xf32>
    %cst_92 = arith.constant 0.000000e+00 : f32
    %591 = vector.broadcast %cst_92 : f32 to vector<1x16x16xf32>
    %592 = arith.select %7, %590, %591 : vector<1x16x16xi1>, vector<1x16x16xf32>
    %c39 = arith.constant 39 : index
    %593 = memref.load %arg2[%c39] : memref<162xf32, #tpu.memory_space<smem>>
    %594 = vector.broadcast %593 : f32 to vector<1x16x16xf32>
    %595 = arith.mulf %594, %592 : vector<1x16x16xf32>
    %596 = arith.addf %581, %595 : vector<1x16x16xf32>
    %c93 = arith.constant 93 : index
    %597 = memref.load %arg2[%c93] : memref<162xf32, #tpu.memory_space<smem>>
    %598 = vector.broadcast %597 : f32 to vector<1x16x16xf32>
    %599 = arith.mulf %598, %592 : vector<1x16x16xf32>
    %600 = arith.addf %585, %599 : vector<1x16x16xf32>
    %c147 = arith.constant 147 : index
    %601 = memref.load %arg2[%c147] : memref<162xf32, #tpu.memory_space<smem>>
    %602 = vector.broadcast %601 : f32 to vector<1x16x16xf32>
    %603 = arith.mulf %602, %592 : vector<1x16x16xf32>
    %604 = arith.addf %589, %603 : vector<1x16x16xf32>
    %c40 = arith.constant 40 : index
    %605 = memref.load %arg2[%c40] : memref<162xf32, #tpu.memory_space<smem>>
    %606 = vector.broadcast %605 : f32 to vector<1x16x16xf32>
    %607 = arith.mulf %606, %544 : vector<1x16x16xf32>
    %608 = arith.addf %596, %607 : vector<1x16x16xf32>
    %c94 = arith.constant 94 : index
    %609 = memref.load %arg2[%c94] : memref<162xf32, #tpu.memory_space<smem>>
    %610 = vector.broadcast %609 : f32 to vector<1x16x16xf32>
    %611 = arith.mulf %610, %544 : vector<1x16x16xf32>
    %612 = arith.addf %600, %611 : vector<1x16x16xf32>
    %c148 = arith.constant 148 : index
    %613 = memref.load %arg2[%c148] : memref<162xf32, #tpu.memory_space<smem>>
    %614 = vector.broadcast %613 : f32 to vector<1x16x16xf32>
    %615 = arith.mulf %614, %544 : vector<1x16x16xf32>
    %616 = arith.addf %604, %615 : vector<1x16x16xf32>
    %c15_i32_93 = arith.constant 15 : i32
    %617 = tpu.dynamic_rotate %544 by %c15_i32_93 dim 2 : vector<1x16x16xf32>, i32 -> vector<1x16x16xf32>
    %cst_94 = arith.constant 0.000000e+00 : f32
    %618 = vector.broadcast %cst_94 : f32 to vector<1x16x16xf32>
    %619 = arith.select %9, %617, %618 : vector<1x16x16xi1>, vector<1x16x16xf32>
    %c41 = arith.constant 41 : index
    %620 = memref.load %arg2[%c41] : memref<162xf32, #tpu.memory_space<smem>>
    %621 = vector.broadcast %620 : f32 to vector<1x16x16xf32>
    %622 = arith.mulf %621, %619 : vector<1x16x16xf32>
    %623 = arith.addf %608, %622 : vector<1x16x16xf32>
    %c95 = arith.constant 95 : index
    %624 = memref.load %arg2[%c95] : memref<162xf32, #tpu.memory_space<smem>>
    %625 = vector.broadcast %624 : f32 to vector<1x16x16xf32>
    %626 = arith.mulf %625, %619 : vector<1x16x16xf32>
    %627 = arith.addf %612, %626 : vector<1x16x16xf32>
    %c149 = arith.constant 149 : index
    %628 = memref.load %arg2[%c149] : memref<162xf32, #tpu.memory_space<smem>>
    %629 = vector.broadcast %628 : f32 to vector<1x16x16xf32>
    %630 = arith.mulf %629, %619 : vector<1x16x16xf32>
    %631 = arith.addf %616, %630 : vector<1x16x16xf32>
    %c15_i32_95 = arith.constant 15 : i32
    %632 = tpu.dynamic_rotate %544 by %c15_i32_95 dim 1 : vector<1x16x16xf32>, i32 -> vector<1x16x16xf32>
    %cst_96 = arith.constant 0.000000e+00 : f32
    %633 = vector.broadcast %cst_96 : f32 to vector<1x16x16xf32>
    %634 = arith.select %5, %632, %633 : vector<1x16x16xi1>, vector<1x16x16xf32>
    %c1_i32_97 = arith.constant 1 : i32
    %635 = tpu.dynamic_rotate %634 by %c1_i32_97 dim 2 : vector<1x16x16xf32>, i32 -> vector<1x16x16xf32>
    %cst_98 = arith.constant 0.000000e+00 : f32
    %636 = vector.broadcast %cst_98 : f32 to vector<1x16x16xf32>
    %637 = arith.select %7, %635, %636 : vector<1x16x16xi1>, vector<1x16x16xf32>
    %c42 = arith.constant 42 : index
    %638 = memref.load %arg2[%c42] : memref<162xf32, #tpu.memory_space<smem>>
    %639 = vector.broadcast %638 : f32 to vector<1x16x16xf32>
    %640 = arith.mulf %639, %637 : vector<1x16x16xf32>
    %641 = arith.addf %623, %640 : vector<1x16x16xf32>
    %c96 = arith.constant 96 : index
    %642 = memref.load %arg2[%c96] : memref<162xf32, #tpu.memory_space<smem>>
    %643 = vector.broadcast %642 : f32 to vector<1x16x16xf32>
    %644 = arith.mulf %643, %637 : vector<1x16x16xf32>
    %645 = arith.addf %627, %644 : vector<1x16x16xf32>
    %c150 = arith.constant 150 : index
    %646 = memref.load %arg2[%c150] : memref<162xf32, #tpu.memory_space<smem>>
    %647 = vector.broadcast %646 : f32 to vector<1x16x16xf32>
    %648 = arith.mulf %647, %637 : vector<1x16x16xf32>
    %649 = arith.addf %631, %648 : vector<1x16x16xf32>
    %c43 = arith.constant 43 : index
    %650 = memref.load %arg2[%c43] : memref<162xf32, #tpu.memory_space<smem>>
    %651 = vector.broadcast %650 : f32 to vector<1x16x16xf32>
    %652 = arith.mulf %651, %634 : vector<1x16x16xf32>
    %653 = arith.addf %641, %652 : vector<1x16x16xf32>
    %c97 = arith.constant 97 : index
    %654 = memref.load %arg2[%c97] : memref<162xf32, #tpu.memory_space<smem>>
    %655 = vector.broadcast %654 : f32 to vector<1x16x16xf32>
    %656 = arith.mulf %655, %634 : vector<1x16x16xf32>
    %657 = arith.addf %645, %656 : vector<1x16x16xf32>
    %c151 = arith.constant 151 : index
    %658 = memref.load %arg2[%c151] : memref<162xf32, #tpu.memory_space<smem>>
    %659 = vector.broadcast %658 : f32 to vector<1x16x16xf32>
    %660 = arith.mulf %659, %634 : vector<1x16x16xf32>
    %661 = arith.addf %649, %660 : vector<1x16x16xf32>
    %c15_i32_99 = arith.constant 15 : i32
    %662 = tpu.dynamic_rotate %634 by %c15_i32_99 dim 2 : vector<1x16x16xf32>, i32 -> vector<1x16x16xf32>
    %cst_100 = arith.constant 0.000000e+00 : f32
    %663 = vector.broadcast %cst_100 : f32 to vector<1x16x16xf32>
    %664 = arith.select %9, %662, %663 : vector<1x16x16xi1>, vector<1x16x16xf32>
    %c44 = arith.constant 44 : index
    %665 = memref.load %arg2[%c44] : memref<162xf32, #tpu.memory_space<smem>>
    %666 = vector.broadcast %665 : f32 to vector<1x16x16xf32>
    %667 = arith.mulf %666, %664 : vector<1x16x16xf32>
    %668 = arith.addf %653, %667 : vector<1x16x16xf32>
    %c98 = arith.constant 98 : index
    %669 = memref.load %arg2[%c98] : memref<162xf32, #tpu.memory_space<smem>>
    %670 = vector.broadcast %669 : f32 to vector<1x16x16xf32>
    %671 = arith.mulf %670, %664 : vector<1x16x16xf32>
    %672 = arith.addf %657, %671 : vector<1x16x16xf32>
    %c152 = arith.constant 152 : index
    %673 = memref.load %arg2[%c152] : memref<162xf32, #tpu.memory_space<smem>>
    %674 = vector.broadcast %673 : f32 to vector<1x16x16xf32>
    %675 = arith.mulf %674, %664 : vector<1x16x16xf32>
    %676 = arith.addf %661, %675 : vector<1x16x16xf32>
    %c0_101 = arith.constant 0 : index
    %c5_102 = arith.constant 5 : index
    %c0_103 = arith.constant 0 : index
    %c0_104 = arith.constant 0 : index
    %677 = vector.load %arg1[%c0_101, %c5_102, %c0_103, %c0_104] : memref<1x6x16x16xf32, #tpu.memory_space<vmem>>, vector<1x1x16x16xf32>
    %678 = vector.shape_cast %677 : vector<1x1x16x16xf32> to vector<1x16x16xf32>
    %c1_i32_105 = arith.constant 1 : i32
    %679 = tpu.dynamic_rotate %678 by %c1_i32_105 dim 1 : vector<1x16x16xf32>, i32 -> vector<1x16x16xf32>
    %cst_106 = arith.constant 0.000000e+00 : f32
    %680 = vector.broadcast %cst_106 : f32 to vector<1x16x16xf32>
    %681 = arith.select %3, %679, %680 : vector<1x16x16xi1>, vector<1x16x16xf32>
    %c1_i32_107 = arith.constant 1 : i32
    %682 = tpu.dynamic_rotate %681 by %c1_i32_107 dim 2 : vector<1x16x16xf32>, i32 -> vector<1x16x16xf32>
    %cst_108 = arith.constant 0.000000e+00 : f32
    %683 = vector.broadcast %cst_108 : f32 to vector<1x16x16xf32>
    %684 = arith.select %7, %682, %683 : vector<1x16x16xi1>, vector<1x16x16xf32>
    %c45 = arith.constant 45 : index
    %685 = memref.load %arg2[%c45] : memref<162xf32, #tpu.memory_space<smem>>
    %686 = vector.broadcast %685 : f32 to vector<1x16x16xf32>
    %687 = arith.mulf %686, %684 : vector<1x16x16xf32>
    %688 = arith.addf %668, %687 : vector<1x16x16xf32>
    %c99 = arith.constant 99 : index
    %689 = memref.load %arg2[%c99] : memref<162xf32, #tpu.memory_space<smem>>
    %690 = vector.broadcast %689 : f32 to vector<1x16x16xf32>
    %691 = arith.mulf %690, %684 : vector<1x16x16xf32>
    %692 = arith.addf %672, %691 : vector<1x16x16xf32>
    %c153 = arith.constant 153 : index
    %693 = memref.load %arg2[%c153] : memref<162xf32, #tpu.memory_space<smem>>
    %694 = vector.broadcast %693 : f32 to vector<1x16x16xf32>
    %695 = arith.mulf %694, %684 : vector<1x16x16xf32>
    %696 = arith.addf %676, %695 : vector<1x16x16xf32>
    %c46 = arith.constant 46 : index
    %697 = memref.load %arg2[%c46] : memref<162xf32, #tpu.memory_space<smem>>
    %698 = vector.broadcast %697 : f32 to vector<1x16x16xf32>
    %699 = arith.mulf %698, %681 : vector<1x16x16xf32>
    %700 = arith.addf %688, %699 : vector<1x16x16xf32>
    %c100 = arith.constant 100 : index
    %701 = memref.load %arg2[%c100] : memref<162xf32, #tpu.memory_space<smem>>
    %702 = vector.broadcast %701 : f32 to vector<1x16x16xf32>
    %703 = arith.mulf %702, %681 : vector<1x16x16xf32>
    %704 = arith.addf %692, %703 : vector<1x16x16xf32>
    %c154 = arith.constant 154 : index
    %705 = memref.load %arg2[%c154] : memref<162xf32, #tpu.memory_space<smem>>
    %706 = vector.broadcast %705 : f32 to vector<1x16x16xf32>
    %707 = arith.mulf %706, %681 : vector<1x16x16xf32>
    %708 = arith.addf %696, %707 : vector<1x16x16xf32>
    %c15_i32_109 = arith.constant 15 : i32
    %709 = tpu.dynamic_rotate %681 by %c15_i32_109 dim 2 : vector<1x16x16xf32>, i32 -> vector<1x16x16xf32>
    %cst_110 = arith.constant 0.000000e+00 : f32
    %710 = vector.broadcast %cst_110 : f32 to vector<1x16x16xf32>
    %711 = arith.select %9, %709, %710 : vector<1x16x16xi1>, vector<1x16x16xf32>
    %c47 = arith.constant 47 : index
    %712 = memref.load %arg2[%c47] : memref<162xf32, #tpu.memory_space<smem>>
    %713 = vector.broadcast %712 : f32 to vector<1x16x16xf32>
    %714 = arith.mulf %713, %711 : vector<1x16x16xf32>
    %715 = arith.addf %700, %714 : vector<1x16x16xf32>
    %c101 = arith.constant 101 : index
    %716 = memref.load %arg2[%c101] : memref<162xf32, #tpu.memory_space<smem>>
    %717 = vector.broadcast %716 : f32 to vector<1x16x16xf32>
    %718 = arith.mulf %717, %711 : vector<1x16x16xf32>
    %719 = arith.addf %704, %718 : vector<1x16x16xf32>
    %c155 = arith.constant 155 : index
    %720 = memref.load %arg2[%c155] : memref<162xf32, #tpu.memory_space<smem>>
    %721 = vector.broadcast %720 : f32 to vector<1x16x16xf32>
    %722 = arith.mulf %721, %711 : vector<1x16x16xf32>
    %723 = arith.addf %708, %722 : vector<1x16x16xf32>
    %c1_i32_111 = arith.constant 1 : i32
    %724 = tpu.dynamic_rotate %678 by %c1_i32_111 dim 2 : vector<1x16x16xf32>, i32 -> vector<1x16x16xf32>
    %cst_112 = arith.constant 0.000000e+00 : f32
    %725 = vector.broadcast %cst_112 : f32 to vector<1x16x16xf32>
    %726 = arith.select %7, %724, %725 : vector<1x16x16xi1>, vector<1x16x16xf32>
    %c48 = arith.constant 48 : index
    %727 = memref.load %arg2[%c48] : memref<162xf32, #tpu.memory_space<smem>>
    %728 = vector.broadcast %727 : f32 to vector<1x16x16xf32>
    %729 = arith.mulf %728, %726 : vector<1x16x16xf32>
    %730 = arith.addf %715, %729 : vector<1x16x16xf32>
    %c102 = arith.constant 102 : index
    %731 = memref.load %arg2[%c102] : memref<162xf32, #tpu.memory_space<smem>>
    %732 = vector.broadcast %731 : f32 to vector<1x16x16xf32>
    %733 = arith.mulf %732, %726 : vector<1x16x16xf32>
    %734 = arith.addf %719, %733 : vector<1x16x16xf32>
    %c156 = arith.constant 156 : index
    %735 = memref.load %arg2[%c156] : memref<162xf32, #tpu.memory_space<smem>>
    %736 = vector.broadcast %735 : f32 to vector<1x16x16xf32>
    %737 = arith.mulf %736, %726 : vector<1x16x16xf32>
    %738 = arith.addf %723, %737 : vector<1x16x16xf32>
    %c49 = arith.constant 49 : index
    %739 = memref.load %arg2[%c49] : memref<162xf32, #tpu.memory_space<smem>>
    %740 = vector.broadcast %739 : f32 to vector<1x16x16xf32>
    %741 = arith.mulf %740, %678 : vector<1x16x16xf32>
    %742 = arith.addf %730, %741 : vector<1x16x16xf32>
    %c103 = arith.constant 103 : index
    %743 = memref.load %arg2[%c103] : memref<162xf32, #tpu.memory_space<smem>>
    %744 = vector.broadcast %743 : f32 to vector<1x16x16xf32>
    %745 = arith.mulf %744, %678 : vector<1x16x16xf32>
    %746 = arith.addf %734, %745 : vector<1x16x16xf32>
    %c157 = arith.constant 157 : index
    %747 = memref.load %arg2[%c157] : memref<162xf32, #tpu.memory_space<smem>>
    %748 = vector.broadcast %747 : f32 to vector<1x16x16xf32>
    %749 = arith.mulf %748, %678 : vector<1x16x16xf32>
    %750 = arith.addf %738, %749 : vector<1x16x16xf32>
    %c15_i32_113 = arith.constant 15 : i32
    %751 = tpu.dynamic_rotate %678 by %c15_i32_113 dim 2 : vector<1x16x16xf32>, i32 -> vector<1x16x16xf32>
    %cst_114 = arith.constant 0.000000e+00 : f32
    %752 = vector.broadcast %cst_114 : f32 to vector<1x16x16xf32>
    %753 = arith.select %9, %751, %752 : vector<1x16x16xi1>, vector<1x16x16xf32>
    %c50 = arith.constant 50 : index
    %754 = memref.load %arg2[%c50] : memref<162xf32, #tpu.memory_space<smem>>
    %755 = vector.broadcast %754 : f32 to vector<1x16x16xf32>
    %756 = arith.mulf %755, %753 : vector<1x16x16xf32>
    %757 = arith.addf %742, %756 : vector<1x16x16xf32>
    %c104 = arith.constant 104 : index
    %758 = memref.load %arg2[%c104] : memref<162xf32, #tpu.memory_space<smem>>
    %759 = vector.broadcast %758 : f32 to vector<1x16x16xf32>
    %760 = arith.mulf %759, %753 : vector<1x16x16xf32>
    %761 = arith.addf %746, %760 : vector<1x16x16xf32>
    %c158 = arith.constant 158 : index
    %762 = memref.load %arg2[%c158] : memref<162xf32, #tpu.memory_space<smem>>
    %763 = vector.broadcast %762 : f32 to vector<1x16x16xf32>
    %764 = arith.mulf %763, %753 : vector<1x16x16xf32>
    %765 = arith.addf %750, %764 : vector<1x16x16xf32>
    %c15_i32_115 = arith.constant 15 : i32
    %766 = tpu.dynamic_rotate %678 by %c15_i32_115 dim 1 : vector<1x16x16xf32>, i32 -> vector<1x16x16xf32>
    %cst_116 = arith.constant 0.000000e+00 : f32
    %767 = vector.broadcast %cst_116 : f32 to vector<1x16x16xf32>
    %768 = arith.select %5, %766, %767 : vector<1x16x16xi1>, vector<1x16x16xf32>
    %c1_i32_117 = arith.constant 1 : i32
    %769 = tpu.dynamic_rotate %768 by %c1_i32_117 dim 2 : vector<1x16x16xf32>, i32 -> vector<1x16x16xf32>
    %cst_118 = arith.constant 0.000000e+00 : f32
    %770 = vector.broadcast %cst_118 : f32 to vector<1x16x16xf32>
    %771 = arith.select %7, %769, %770 : vector<1x16x16xi1>, vector<1x16x16xf32>
    %c51 = arith.constant 51 : index
    %772 = memref.load %arg2[%c51] : memref<162xf32, #tpu.memory_space<smem>>
    %773 = vector.broadcast %772 : f32 to vector<1x16x16xf32>
    %774 = arith.mulf %773, %771 : vector<1x16x16xf32>
    %775 = arith.addf %757, %774 : vector<1x16x16xf32>
    %c105 = arith.constant 105 : index
    %776 = memref.load %arg2[%c105] : memref<162xf32, #tpu.memory_space<smem>>
    %777 = vector.broadcast %776 : f32 to vector<1x16x16xf32>
    %778 = arith.mulf %777, %771 : vector<1x16x16xf32>
    %779 = arith.addf %761, %778 : vector<1x16x16xf32>
    %c159 = arith.constant 159 : index
    %780 = memref.load %arg2[%c159] : memref<162xf32, #tpu.memory_space<smem>>
    %781 = vector.broadcast %780 : f32 to vector<1x16x16xf32>
    %782 = arith.mulf %781, %771 : vector<1x16x16xf32>
    %783 = arith.addf %765, %782 : vector<1x16x16xf32>
    %c52 = arith.constant 52 : index
    %784 = memref.load %arg2[%c52] : memref<162xf32, #tpu.memory_space<smem>>
    %785 = vector.broadcast %784 : f32 to vector<1x16x16xf32>
    %786 = arith.mulf %785, %768 : vector<1x16x16xf32>
    %787 = arith.addf %775, %786 : vector<1x16x16xf32>
    %c106 = arith.constant 106 : index
    %788 = memref.load %arg2[%c106] : memref<162xf32, #tpu.memory_space<smem>>
    %789 = vector.broadcast %788 : f32 to vector<1x16x16xf32>
    %790 = arith.mulf %789, %768 : vector<1x16x16xf32>
    %791 = arith.addf %779, %790 : vector<1x16x16xf32>
    %c160 = arith.constant 160 : index
    %792 = memref.load %arg2[%c160] : memref<162xf32, #tpu.memory_space<smem>>
    %793 = vector.broadcast %792 : f32 to vector<1x16x16xf32>
    %794 = arith.mulf %793, %768 : vector<1x16x16xf32>
    %795 = arith.addf %783, %794 : vector<1x16x16xf32>
    %c15_i32_119 = arith.constant 15 : i32
    %796 = tpu.dynamic_rotate %768 by %c15_i32_119 dim 2 : vector<1x16x16xf32>, i32 -> vector<1x16x16xf32>
    %cst_120 = arith.constant 0.000000e+00 : f32
    %797 = vector.broadcast %cst_120 : f32 to vector<1x16x16xf32>
    %798 = arith.select %9, %796, %797 : vector<1x16x16xi1>, vector<1x16x16xf32>
    %c53 = arith.constant 53 : index
    %799 = memref.load %arg2[%c53] : memref<162xf32, #tpu.memory_space<smem>>
    %800 = vector.broadcast %799 : f32 to vector<1x16x16xf32>
    %801 = arith.mulf %800, %798 : vector<1x16x16xf32>
    %802 = arith.addf %787, %801 : vector<1x16x16xf32>
    %c107 = arith.constant 107 : index
    %803 = memref.load %arg2[%c107] : memref<162xf32, #tpu.memory_space<smem>>
    %804 = vector.broadcast %803 : f32 to vector<1x16x16xf32>
    %805 = arith.mulf %804, %798 : vector<1x16x16xf32>
    %806 = arith.addf %791, %805 : vector<1x16x16xf32>
    %c161 = arith.constant 161 : index
    %807 = memref.load %arg2[%c161] : memref<162xf32, #tpu.memory_space<smem>>
    %808 = vector.broadcast %807 : f32 to vector<1x16x16xf32>
    %809 = arith.mulf %808, %798 : vector<1x16x16xf32>
    %810 = arith.addf %795, %809 : vector<1x16x16xf32>
    %c0_121 = arith.constant 0 : index
    %811 = memref.load %arg3[%c0_121] : memref<3xf32, #tpu.memory_space<smem>>
    %812 = vector.broadcast %811 : f32 to vector<1x16x16xf32>
    %813 = arith.addf %802, %812 : vector<1x16x16xf32>
    %c0_122 = arith.constant 0 : index
    %c0_123 = arith.constant 0 : index
    %c0_124 = arith.constant 0 : index
    %c0_125 = arith.constant 0 : index
    %814 = vector.load %arg4[%c0_122, %c0_123, %c0_124, %c0_125] : memref<1x3x16x16xf32, #tpu.memory_space<vmem>>, vector<1x1x16x16xf32>
    %815 = vector.shape_cast %814 : vector<1x1x16x16xf32> to vector<1x16x16xf32>
    %816 = vector.shape_cast %813 : vector<1x16x16xf32> to vector<1x1x16x16xf32>
    tpu.vector_store %arg4[%c0_122, %c0_123, %c0_124, %c0_125], %816 {strides = array<i32>} : memref<1x3x16x16xf32, #tpu.memory_space<vmem>>, vector<1x1x16x16xf32>,
    %c1_126 = arith.constant 1 : index
    %817 = memref.load %arg3[%c1_126] : memref<3xf32, #tpu.memory_space<smem>>
    %818 = vector.broadcast %817 : f32 to vector<1x16x16xf32>
    %819 = arith.addf %806, %818 : vector<1x16x16xf32>
    %c0_127 = arith.constant 0 : index
    %c1_128 = arith.constant 1 : index
    %c0_129 = arith.constant 0 : index
    %c0_130 = arith.constant 0 : index
    %820 = vector.load %arg4[%c0_127, %c1_128, %c0_129, %c0_130] : memref<1x3x16x16xf32, #tpu.memory_space<vmem>>, vector<1x1x16x16xf32>
    %821 = vector.shape_cast %820 : vector<1x1x16x16xf32> to vector<1x16x16xf32>
    %822 = vector.shape_cast %819 : vector<1x16x16xf32> to vector<1x1x16x16xf32>
    tpu.vector_store %arg4[%c0_127, %c1_128, %c0_129, %c0_130], %822 {strides = array<i32>} : memref<1x3x16x16xf32, #tpu.memory_space<vmem>>, vector<1x1x16x16xf32>,
    %c2_131 = arith.constant 2 : index
    %823 = memref.load %arg3[%c2_131] : memref<3xf32, #tpu.memory_space<smem>>
    %824 = vector.broadcast %823 : f32 to vector<1x16x16xf32>
    %825 = arith.addf %810, %824 : vector<1x16x16xf32>
    %c0_132 = arith.constant 0 : index
    %c2_133 = arith.constant 2 : index
    %c0_134 = arith.constant 0 : index
    %c0_135 = arith.constant 0 : index
    %826 = vector.load %arg4[%c0_132, %c2_133, %c0_134, %c0_135] : memref<1x3x16x16xf32, #tpu.memory_space<vmem>>, vector<1x1x16x16xf32>
    %827 = vector.shape_cast %826 : vector<1x1x16x16xf32> to vector<1x16x16xf32>
    %828 = vector.shape_cast %825 : vector<1x16x16xf32> to vector<1x1x16x16xf32>
    tpu.vector_store %arg4[%c0_132, %c2_133, %c0_134, %c0_135], %828 {strides = array<i32>} : memref<1x3x16x16xf32, #tpu.memory_space<vmem>>, vector<1x1x16x16xf32>,
    return
  }
  func.func @transform_0(%arg0: i32) -> (i32, i32, i32, i32) {
    %c0_i32 = arith.constant 0 : i32
    %c0_i32_0 = arith.constant 0 : i32
    %c0_i32_1 = arith.constant 0 : i32
    %c0_i32_2 = arith.constant 0 : i32
    return %arg0, %c0_i32, %c0_i32_0, %c0_i32_1 : i32, i32, i32, i32
  }
  func.func @transform_1(%arg0: i32) -> i32 {
    %c0_i32 = arith.constant 0 : i32
    %c0_i32_0 = arith.constant 0 : i32
    return %c0_i32 : i32
  }
  func.func @transform_2(%arg0: i32) -> i32 {
    %c0_i32 = arith.constant 0 : i32
    %c0_i32_0 = arith.constant 0 : i32
    return %c0_i32 : i32
  }
  func.func @transform_3(%arg0: i32) -> (i32, i32, i32, i32) {
    %c0_i32 = arith.constant 0 : i32
    %c0_i32_0 = arith.constant 0 : i32
    %c0_i32_1 = arith.constant 0 : i32
    %c0_i32_2 = arith.constant 0 : i32
    return %arg0, %c0_i32, %c0_i32_0, %c0_i32_1 : i32, i32, i32, i32
  }
}

</mosaic_0001>

<llo_original>
// kernel: tpu_custom_call.1
$region0: #{tpu_custom_call.1}
  #allocation0 [shape = 'u32[]', space=smem, size = 0x4, offset = 0x4, fixed_abs, tag = 'smem constant byte address 0x4 - core index']
  #allocation1 [shape = 'u32[144,128]{1,0:T(1,128)}', space=vmem, size = 0x12000, scoped, tag = 'internal scratch']
  %s0 = inlined_call_operand.hbm [shape: f32[2,6,16,16], index: 0, kind: input, shape index: {}]
  %s1 = inlined_call_operand.vmem [shape: f32[162], index: 1, kind: input, shape index: {}]
  %s2 = inlined_call_operand.vmem [shape: f32[3], index: 2, kind: input, shape index: {}]
  %s3 = inlined_call_operand.hbm [shape: f32[2,3,16,16], index: 3, kind: output, shape index: {}]
  %s4 = sld [smem:[#allocation0]]
  $region57: #{tpu_custom_call.1} parent=0
    _
  %s6 = ssub.s32 1, %s4
  %s7 = scalar_select 0, %s6, %s4
  $region1: #{tpu_custom_call.1} parent=0
    #allocation2 [shape = 'u8[98304]{0}', space=vmem, size = 0x18000, scoped, tag = 'input window, operand 0']
    #allocation3 [shape = 's32[2]{0}', space=sflag, size = 0x8, scoped, tag = 'scoped memory for tpu_custom_call.1']
    #allocation4 [shape = 's32[2]{0}', space=sflag, size = 0x8, scoped, tag = 'scoped memory for tpu_custom_call.1']
    #allocation5 [shape = 's32[2]{0}', space=sflag, size = 0x8, scoped, tag = 'scoped memory for tpu_custom_call.1']
    #allocation6 [shape = 'u8[1024]{0}', space=smem, size = 0x400, scoped, tag = 'input window, operand 1, single buffered']
    #allocation7 [shape = 'u8[512]{0}', space=smem, size = 0x200, scoped, tag = 'input window, operand 2, single buffered']
    #allocation8 [shape = 's32[1]{0}', space=sflag, size = 0x4, scoped, tag = 'scoped memory for tpu_custom_call.1']
    #allocation9 [shape = 'u8[49152]{0}', space=vmem, size = 0xc000, scoped, tag = 'output window, operand 0']
    %8 = vsyncpa [#allocation3], 0
    %s9 = scalar_lea.sflag [#allocation3], 1
    %10 = vsyncpa %s9, 0
    %11 = vsyncpa [#allocation5], 0
    %12 = vsyncpa [#allocation8], 0
    %13 = vsyncpa [#allocation4], 0
    %s14 = scalar_lea.sflag [#allocation4], 1
    %15 = vsyncpa %s14, 0
    loop: start=0, step=1, limit=4
    $region2: #{tpu_custom_call.1} parent=1 // loop_pre_header
      _
    $region3: #{tpu_custom_call.1} parent=1 // loop_header
      %s17 = sphi 0, %s21
      %p18 = scmp.ge.s32.totalorder %s17, 4
      %s27 = sphi 0, %s29
      %s30 = sphi 0, %s27
      %s31 = sphi 0, %s30
      %s47 = sphi 0, %s31
      %s51 = sphi 0, %s51
      %s53 = sphi 0, %s51
      %s54 = sphi 0, %s53
      %s68 = sphi 0, %s54
      %s72 = sphi 0, %s72
      %s74 = sphi 0, %s72
      %s75 = sphi 0, %s74
      %s89 = sphi 0, %s75
      %s95 = sphi 0, %s97
      %s98 = sphi 0, %s95
      %s99 = sphi 0, %s98
      %s115 = sphi 0, %s99
    $region4: #{tpu_custom_call.1} parent=1 // loop_header_branch
      %20 = sbr.rel (%p18) target = $region8
    $region5: #{tpu_custom_call.1} parent=1 // loop_body
      %s22 = ssub.s32 %s17, 1
      %s23 = ssub.s32 %s17, 2
      %s24 = sadd.s32 %s17, 1
      %s25 = ssub.s32 %s17, %s24
      %p26 = scmp.eq.s32.totalorder %s25, 0
      %s28 = sadd.s32 %s27, 1
      %s29 = scalar_select %p26, %s27, %s28
      %p32 = pneg %p26
      %p33 = scmp.eq.s32.totalorder %s17, 1
      %p34 = por %p32, %p33
      %p35 = scmp.ne.s32.totalorder %s27, %s30
      %p36 = scmp.eq.s32.totalorder %s17, 0
      %p37 = por %p35, %p36
      %p38 = scmp.ne.s32.totalorder %s27, %s30
      %p39 = scmp.eq.s32.totalorder %s22, 1
      %p40 = por %p38, %p39
      %p41 = scmp.ne.s32.totalorder %s30, %s31
      %p42 = scmp.eq.s32.totalorder %s22, 0
      %p43 = por %p41, %p42
      %p44 = scmp.ne.s32.totalorder %s30, %s31
      %p45 = scmp.eq.s32.totalorder %s23, 1
      %p46 = por %p44, %p45
      %p48 = scmp.ne.s32.totalorder %s31, %s47
      %p49 = scmp.eq.s32.totalorder %s23, 0
      %p50 = por %p48, %p49
      %s52 = sadd.s32 %s51, 1
      %p55 = scmp.eq.s32.totalorder %s17, 1
      %p56 = scmp.ne.s32.totalorder %s51, %s53
      %p57 = scmp.eq.s32.totalorder %s17, 0
      %p58 = por %p56, %p57
      %p59 = scmp.ne.s32.totalorder %s51, %s53
      %p60 = scmp.eq.s32.totalorder %s22, 1
      %p61 = por %p59, %p60
      %p62 = scmp.ne.s32.totalorder %s53, %s54
      %p63 = scmp.eq.s32.totalorder %s22, 0
      %p64 = por %p62, %p63
      %p65 = scmp.ne.s32.totalorder %s53, %s54
      %p66 = scmp.eq.s32.totalorder %s23, 1
      %p67 = por %p65, %p66
      %p69 = scmp.ne.s32.totalorder %s54, %s68
      %p70 = scmp.eq.s32.totalorder %s23, 0
      %p71 = por %p69, %p70
      %s73 = sadd.s32 %s72, 1
      %p76 = scmp.eq.s32.totalorder %s17, 1
      %p77 = scmp.ne.s32.totalorder %s72, %s74
      %p78 = scmp.eq.s32.totalorder %s17, 0
      %p79 = por %p77, %p78
      %p80 = scmp.ne.s32.totalorder %s72, %s74
      %p81 = scmp.eq.s32.totalorder %s22, 1
      %p82 = por %p80, %p81
      %p83 = scmp.ne.s32.totalorder %s74, %s75
      %p84 = scmp.eq.s32.totalorder %s22, 0
      %p85 = por %p83, %p84
      %p86 = scmp.ne.s32.totalorder %s74, %s75
      %p87 = scmp.eq.s32.totalorder %s23, 1
      %p88 = por %p86, %p87
      %p90 = scmp.ne.s32.totalorder %s75, %s89
      %p91 = scmp.eq.s32.totalorder %s23, 0
      %p92 = por %p90, %p91
      %s93 = ssub.s32 %s17, %s24
      %p94 = scmp.eq.s32.totalorder %s93, 0
      %s96 = sadd.s32 %s95, 1
      %s97 = scalar_select %p94, %s95, %s96
      %p100 = pneg %p94
      %p101 = scmp.eq.s32.totalorder %s17, 1
      %p102 = por %p100, %p101
      %p103 = scmp.ne.s32.totalorder %s95, %s98
      %p104 = scmp.eq.s32.totalorder %s17, 0
      %p105 = por %p103, %p104
      %p106 = scmp.ne.s32.totalorder %s95, %s98
      %p107 = scmp.eq.s32.totalorder %s22, 1
      %p108 = por %p106, %p107
      %p109 = scmp.ne.s32.totalorder %s98, %s99
      %p110 = scmp.eq.s32.totalorder %s22, 0
      %p111 = por %p109, %p110
      %p112 = scmp.ne.s32.totalorder %s98, %s99
      %p113 = scmp.eq.s32.totalorder %s23, 1
      %p114 = por %p112, %p113
      %p116 = scmp.ne.s32.totalorder %s99, %s115
      %p117 = scmp.eq.s32.totalorder %s23, 0
      %p118 = por %p116, %p117
      %p119 = scmp.le.s32.totalorder 1, %s17
      %p120 = scmp.lt.s32.totalorder %s17, 3
      %p121 = pnand %p119, %p120
      %p122 = pneg %p121
      // Predicated region
      $region9: #{tpu_custom_call.1} parent=5 // pred_check
        _
      $region10: #{tpu_custom_call.1} parent=5 // pred_check_branch
        %124 = sbr.rel (%p121) target = $region12
      $region11: #{tpu_custom_call.1} parent=5 // pred_region
        %s125 = ssub.s32 %s17, 1
        // Predicated region
        $region13: #{tpu_custom_call.1} parent=11 // pred_check
          %p126 = pneg %p64
        $region14: #{tpu_custom_call.1} parent=11 // pred_check_branch
          %128 = sbr.rel (%p126) target = $region16
        $region15: #{tpu_custom_call.1} parent=11 // pred_region
          %s130 = ssub.s32 32, 32
          %131 = vsyncadd [#allocation5], %s130
          %s133 = sshll.u32 %s1, 4
          %s134 = int_to_ptr.vmem [resolvable:$true] %s133
          %136 = dma.vmem_to_smem %s134, 32, [#allocation6], [#allocation5]
        $region16: #{tpu_custom_call.1} parent=11 // pred_fallthru
          _
        // Predicated region
        $region17: #{tpu_custom_call.1} parent=11 // pred_check
          %p137 = pneg %p85
        $region18: #{tpu_custom_call.1} parent=11 // pred_check_branch
          %139 = sbr.rel (%p137) target = $region20
        $region19: #{tpu_custom_call.1} parent=11 // pred_region
          %s141 = ssub.s32 16, 16
          %142 = vsyncadd [#allocation8], %s141
          %s144 = sshll.u32 %s2, 4
          %s145 = int_to_ptr.vmem [resolvable:$true] %s144
          %147 = dma.vmem_to_smem %s145, 16, [#allocation7], [#allocation8]
        $region20: #{tpu_custom_call.1} parent=11 // pred_fallthru
          _
      $region12: #{tpu_custom_call.1} parent=5 // pred_fallthru
        _
      %p148 = scmp.lt.s32.totalorder %s17, 2
      // Predicated region
      $region21: #{tpu_custom_call.1} parent=5 // pred_check
        %p149 = pneg %p148
      $region22: #{tpu_custom_call.1} parent=5 // pred_check_branch
        %151 = sbr.rel (%p149) target = $region24
      $region23: #{tpu_custom_call.1} parent=5 // pred_region
        // Predicated region
        $region25: #{tpu_custom_call.1} parent=23 // pred_check
          %p152 = pneg %p37
        $region26: #{tpu_custom_call.1} parent=23 // pred_check_branch
          %154 = sbr.rel (%p152) target = $region28
        $region27: #{tpu_custom_call.1} parent=23 // pred_region
          %s155 = sand.u32 %s27, 1
          %s156 = scalar_lea.sflag [#allocation3], %s155
          %s157 = sand.u32 %s27, 1
          %s158 = smul.addr %s157, 96
          %s159 = scalar_lea.vmem [#allocation2], %s158
          %s161 = ssub.s32 1536, 1536
          %162 = vsyncadd %s156, %s161
          %s163 = smul.addr %s17, 12
          %s164 = smul.addr %s163, 128
          %s165 = scalar_lea.hbm %s0, %s164
          %s166 = sshll.u32 %s159, 4
          %s167 = int_to_ptr.vmem [resolvable:$true] %s166
          %172 = dma.hbm_to_vmem [thread:$0]  %s165, 1536, %s167, %s156, 128, 128, 8
        $region28: #{tpu_custom_call.1} parent=23 // pred_fallthru
          _
      $region24: #{tpu_custom_call.1} parent=5 // pred_fallthru
        _
      %p173 = scmp.le.s32.totalorder 1, %s17
      %p174 = scmp.lt.s32.totalorder %s17, 3
      %p175 = pnand %p173, %p174
      %p176 = pneg %p175
      // Predicated region
      $region29: #{tpu_custom_call.1} parent=5 // pred_check
        _
      $region30: #{tpu_custom_call.1} parent=5 // pred_check_branch
        %178 = sbr.rel (%p175) target = $region32
      $region31: #{tpu_custom_call.1} parent=5 // pred_region
        %s179 = ssub.s32 %s17, 1
        %s180 = sand.u32 %s30, 1
        %s181 = scalar_lea.sflag [#allocation3], %s180
        %s182 = sand.u32 %s30, 1
        %s183 = smul.addr %s182, 96
        %s184 = scalar_lea.vmem [#allocation2], %s183
        // Predicated region
        $region33: #{tpu_custom_call.1} parent=31 // pred_check
          %p185 = pneg %p43
        $region34: #{tpu_custom_call.1} parent=31 // pred_check_branch
          %187 = sbr.rel (%p185) target = $region36
        $region35: #{tpu_custom_call.1} parent=31 // pred_region
          %188 = dma.done %s181, 1536
        $region36: #{tpu_custom_call.1} parent=31 // pred_fallthru
          _
        // Predicated region
        $region37: #{tpu_custom_call.1} parent=31 // pred_check
          %p189 = pneg %p64
        $region38: #{tpu_custom_call.1} parent=31 // pred_check_branch
          %191 = sbr.rel (%p189) target = $region40
        $region39: #{tpu_custom_call.1} parent=31 // pred_region
          %192 = dma.done [#allocation5], 32
        $region40: #{tpu_custom_call.1} parent=31 // pred_fallthru
          _
        // Predicated region
        $region41: #{tpu_custom_call.1} parent=31 // pred_check
          %p193 = pneg %p85
        $region42: #{tpu_custom_call.1} parent=31 // pred_check_branch
          %195 = sbr.rel (%p193) target = $region44
        $region43: #{tpu_custom_call.1} parent=31 // pred_region
          %196 = dma.done [#allocation8], 16
        $region44: #{tpu_custom_call.1} parent=31 // pred_fallthru
          _
        %197 = sfence
        %s198 = sand.u32 %s30, 1
        %s199 = scalar_lea.sflag [#allocation3], %s198
        %s200 = sand.u32 %s30, 1
        %s201 = smul.addr %s200, 96
        %s202 = scalar_lea.vmem [#allocation2], %s201
        %p203 = pneg %p43
        %p204 = pneg %p40
        %p205 = pneg %p64
        %p206 = pneg %p61
        %p207 = pneg %p85
        %p208 = pneg %p82
        %p209 = pneg %p111
        %p210 = pneg %p108
        %s211 = sand.u32 %s98, 1
        %s212 = scalar_lea.sflag [#allocation4], %s211
        %s213 = sand.u32 %s98, 1
        %s214 = smul.addr %s213, 48
        %s215 = scalar_lea.vmem [#allocation9], %s214
        %v216 = vlaneseq
        %v217 = vshrl.u32 %v216, 7
        %v218 = vadd.s32 %v217, 8
        %v219 = vlaneseq
        %v220 = vand.u32 %v219, 127
        %vm221 = vcmp.ge.s32.totalorder %v217, 1
        %vm222 = vcmp.ge.s32.totalorder %v218, 1
        %vm223 = vcmp.lt.s32.totalorder %v217, 15
        %vm224 = vcmp.lt.s32.totalorder %v218, 15
        %vm225 = vcmp.ge.s32.totalorder %v220, 1
        %vm226 = vcmp.lt.s32.totalorder %v220, 15
        %v227 = vld [vmem:[%s184] sm:$0xff]
        %v228 = vld [vmem:[%s184 + $0x8] sm:$0xff]
        %s229 = sld [smem:[#allocation6 + $0x4]]
        %v230 = vstv %s229
        %v231 = vmul.f32 %v230, %v227
        %v232 = vmul.f32 %v230, %v228
        %s233 = sld [smem:[#allocation6 + $0x3a]]
        %v234 = vstv %s233
        %v235 = vmul.f32 %v234, %v227
        %v236 = vmul.f32 %v234, %v228
        %s237 = sld [smem:[#allocation6 + $0x70]]
        %v238 = vstv %s237
        %v239 = vmul.f32 %v238, %v227
        %v240 = vmul.f32 %v238, %v228
        %v241 = vrot.slane %v227, 7
        %v242 = vrot.slane %v228, 7
        %vm243 = vcmp.lt.s32.totalorder %v217, 1
        %v244 = vsel %vm243, %v241, %v242
        %v245 = vsel %vm243, %v242, %v241
        %v246 = vsel %vm221, %v245, 0.0
        %v247 = vsel %vm222, %v244, 0.0
        %vm248 = vcmask 1047680
        %249 = vrot.lane.b32.xlu0 %v246, 16
        %v250 = vpop.permute.xlu0 %249
        %v251 = vsel %vm248, %v250, %v246
        %252 = vrot.lane.b32.xlu0 %v247, 16
        %v253 = vpop.permute.xlu0 %252
        %v254 = vsel %vm248, %v253, %v247
        %255 = vrot.lane.b32.xlu0 %v251, 16
        %v256 = vpop.permute.xlu0 %255
        %257 = vrot.lane.b32.xlu0 %v254, 16
        %v258 = vpop.permute.xlu0 %257
        %v259 = vsel %vm248, %v256, %v246
        %v260 = vsel %vm248, %v258, %v247
        %263 = vrot.lane.b32.xlu0 %v259, 113
        %v264 = vpop.permute.xlu0 %263
        %265 = vrot.lane.b32.xlu0 %v260, 113
        %v266 = vpop.permute.xlu0 %265
        %v269 = vsel %vm225, %v264, 0.0
        %v270 = vsel %vm225, %v266, 0.0
        %s271 = sld [smem:[#allocation6]]
        %v272 = vstv %s271
        %v273 = vmul.f32 %v272, %v269
        %v274 = vmul.f32 %v272, %v270
        %v275 = vadd.f32 %v231, %v273
        %v276 = vadd.f32 %v232, %v274
        %s277 = sld [smem:[#allocation6 + $0x36]]
        %v278 = vstv %s277
        %v279 = vmul.f32 %v278, %v269
        %v280 = vmul.f32 %v278, %v270
        %v281 = vadd.f32 %v235, %v279
        %v282 = vadd.f32 %v236, %v280
        %s283 = sld [smem:[#allocation6 + $0x6c]]
        %v284 = vstv %s283
        %v285 = vmul.f32 %v284, %v269
        %v286 = vmul.f32 %v284, %v270
        %v287 = vadd.f32 %v239, %v285
        %v288 = vadd.f32 %v240, %v286
        %s289 = sld [smem:[#allocation6 + $0x1]]
        %v290 = vstv %s289
        %v291 = vmul.f32 %v290, %v246
        %v292 = vmul.f32 %v290, %v247
        %v293 = vadd.f32 %v275, %v291
        %v294 = vadd.f32 %v276, %v292
        %s295 = sld [smem:[#allocation6 + $0x37]]
        %v296 = vstv %s295
        %v297 = vmul.f32 %v296, %v246
        %v298 = vmul.f32 %v296, %v247
        %v299 = vadd.f32 %v281, %v297
        %v300 = vadd.f32 %v282, %v298
        %s301 = sld [smem:[#allocation6 + $0x6d]]
        %v302 = vstv %s301
        %v303 = vmul.f32 %v302, %v246
        %v304 = vmul.f32 %v302, %v247
        %v305 = vadd.f32 %v287, %v303
        %v306 = vadd.f32 %v288, %v304
        %307 = vrot.lane.b32.xlu0 %v259, 127
        %v308 = vpop.permute.xlu0 %307
        %309 = vrot.lane.b32.xlu0 %v260, 127
        %v310 = vpop.permute.xlu0 %309
        %v313 = vsel %vm226, %v308, 0.0
        %v314 = vsel %vm226, %v310, 0.0
        %s315 = sld [smem:[#allocation6 + $0x2]]
        %v316 = vstv %s315
        %v317 = vmul.f32 %v316, %v313
        %v318 = vmul.f32 %v316, %v314
        %v319 = vadd.f32 %v293, %v317
        %v320 = vadd.f32 %v294, %v318
        %s321 = sld [smem:[#allocation6 + $0x38]]
        %v322 = vstv %s321
        %v323 = vmul.f32 %v322, %v313
        %v324 = vmul.f32 %v322, %v314
        %v325 = vadd.f32 %v299, %v323
        %v326 = vadd.f32 %v300, %v324
        %s327 = sld [smem:[#allocation6 + $0x6e]]
        %v328 = vstv %s327
        %v329 = vmul.f32 %v328, %v313
        %v330 = vmul.f32 %v328, %v314
        %v331 = vadd.f32 %v305, %v329
        %v332 = vadd.f32 %v306, %v330
        %333 = vrot.lane.b32.xlu0 %v227, 16
        %v334 = vpop.permute.xlu0 %333
        %v335 = vsel %vm248, %v334, %v227
        %336 = vrot.lane.b32.xlu0 %v228, 16
        %v337 = vpop.permute.xlu0 %336
        %v338 = vsel %vm248, %v337, %v228
        %339 = vrot.lane.b32.xlu0 %v335, 16
        %v340 = vpop.permute.xlu0 %339
        %341 = vrot.lane.b32.xlu0 %v338, 16
        %v342 = vpop.permute.xlu0 %341
        %v343 = vsel %vm248, %v340, %v227
        %v344 = vsel %vm248, %v342, %v228
        %347 = vrot.lane.b32.xlu0 %v343, 113
        %v348 = vpop.permute.xlu0 %347
        %349 = vrot.lane.b32.xlu0 %v344, 113
        %v350 = vpop.permute.xlu0 %349
        %v353 = vsel %vm225, %v348, 0.0
        %v354 = vsel %vm225, %v350, 0.0
        %s355 = sld [smem:[#allocation6 + $0x3]]
        %v356 = vstv %s355
        %v357 = vmul.f32 %v356, %v353
        %v358 = vmul.f32 %v356, %v354
        %v359 = vadd.f32 %v319, %v357
        %v360 = vadd.f32 %v320, %v358
        %s361 = sld [smem:[#allocation6 + $0x39]]
        %v362 = vstv %s361
        %v363 = vmul.f32 %v362, %v353
        %v364 = vmul.f32 %v362, %v354
        %v365 = vadd.f32 %v325, %v363
        %v366 = vadd.f32 %v326, %v364
        %s367 = sld [smem:[#allocation6 + $0x6f]]
        %v368 = vstv %s367
        %v369 = vmul.f32 %v368, %v353
        %v370 = vmul.f32 %v368, %v354
        %v371 = vadd.f32 %v331, %v369
        %v372 = vadd.f32 %v332, %v370
        %373 = vrot.lane.b32.xlu0 %v343, 127
        %v374 = vpop.permute.xlu0 %373
        %375 = vrot.lane.b32.xlu0 %v344, 127
        %v376 = vpop.permute.xlu0 %375
        %v379 = vsel %vm226, %v374, 0.0
        %v380 = vsel %vm226, %v376, 0.0
        %s381 = sld [smem:[#allocation6 + $0x5]]
        %v382 = vstv %s381
        %v383 = vmul.f32 %v382, %v379
        %v384 = vmul.f32 %v382, %v380
        %v385 = vadd.f32 %v359, %v383
        %v386 = vadd.f32 %v360, %v384
        %s387 = sld [smem:[#allocation6 + $0x3b]]
        %v388 = vstv %s387
        %v389 = vmul.f32 %v388, %v379
        %v390 = vmul.f32 %v388, %v380
        %v391 = vadd.f32 %v365, %v389
        %v392 = vadd.f32 %v366, %v390
        %s393 = sld [smem:[#allocation6 + $0x71]]
        %v394 = vstv %s393
        %v395 = vmul.f32 %v394, %v379
        %v396 = vmul.f32 %v394, %v380
        %v397 = vadd.f32 %v371, %v395
        %v398 = vadd.f32 %v372, %v396
        %v399 = vrot.slane %v227, 1
        %v400 = vrot.slane %v228, 1
        %vm401 = vcmp.lt.s32.totalorder %v217, 7
        %v402 = vsel %vm401, %v399, %v400
        %v403 = vsel %vm401, %v400, %v399
        %v404 = vsel %vm223, %v402, 0.0
        %v405 = vsel %vm224, %v403, 0.0
        %406 = vrot.lane.b32.xlu0 %v404, 16
        %v407 = vpop.permute.xlu0 %406
        %v408 = vsel %vm248, %v407, %v404
        %409 = vrot.lane.b32.xlu0 %v405, 16
        %v410 = vpop.permute.xlu0 %409
        %v411 = vsel %vm248, %v410, %v405
        %412 = vrot.lane.b32.xlu0 %v408, 16
        %v413 = vpop.permute.xlu0 %412
        %414 = vrot.lane.b32.xlu0 %v411, 16
        %v415 = vpop.permute.xlu0 %414
        %v416 = vsel %vm248, %v413, %v404
        %v417 = vsel %vm248, %v415, %v405
        %420 = vrot.lane.b32.xlu0 %v416, 113
        %v421 = vpop.permute.xlu0 %420
        %422 = vrot.lane.b32.xlu0 %v417, 113
        %v423 = vpop.permute.xlu0 %422
        %v426 = vsel %vm225, %v421, 0.0
        %v427 = vsel %vm225, %v423, 0.0
        %s428 = sld [smem:[#allocation6 + $0x6]]
        %v429 = vstv %s428
        %v430 = vmul.f32 %v429, %v426
        %v431 = vmul.f32 %v429, %v427
        %v432 = vadd.f32 %v385, %v430
        %v433 = vadd.f32 %v386, %v431
        %s434 = sld [smem:[#allocation6 + $0x3c]]
        %v435 = vstv %s434
        %v436 = vmul.f32 %v435, %v426
        %v437 = vmul.f32 %v435, %v427
        %v438 = vadd.f32 %v391, %v436
        %v439 = vadd.f32 %v392, %v437
        %s440 = sld [smem:[#allocation6 + $0x72]]
        %v441 = vstv %s440
        %v442 = vmul.f32 %v441, %v426
        %v443 = vmul.f32 %v441, %v427
        %v444 = vadd.f32 %v397, %v442
        %v445 = vadd.f32 %v398, %v443
        %s446 = sld [smem:[#allocation6 + $0x7]]
        %v447 = vstv %s446
        %v448 = vmul.f32 %v447, %v404
        %v449 = vmul.f32 %v447, %v405
        %v450 = vadd.f32 %v432, %v448
        %v451 = vadd.f32 %v433, %v449
        %s452 = sld [smem:[#allocation6 + $0x3d]]
        %v453 = vstv %s452
        %v454 = vmul.f32 %v453, %v404
        %v455 = vmul.f32 %v453, %v405
        %v456 = vadd.f32 %v438, %v454
        %v457 = vadd.f32 %v439, %v455
        %s458 = sld [smem:[#allocation6 + $0x73]]
        %v459 = vstv %s458
        %v460 = vmul.f32 %v459, %v404
        %v461 = vmul.f32 %v459, %v405
        %v462 = vadd.f32 %v444, %v460
        %v463 = vadd.f32 %v445, %v461
        %464 = vrot.lane.b32.xlu0 %v416, 127
        %v465 = vpop.permute.xlu0 %464
        %466 = vrot.lane.b32.xlu0 %v417, 127
        %v467 = vpop.permute.xlu0 %466
        %v470 = vsel %vm226, %v465, 0.0
        %v471 = vsel %vm226, %v467, 0.0
        %s472 = sld [smem:[#allocation6 + $0x8]]
        %v473 = vstv %s472
        %v474 = vmul.f32 %v473, %v470
        %v475 = vmul.f32 %v473, %v471
        %v476 = vadd.f32 %v450, %v474
        %v477 = vadd.f32 %v451, %v475
        %s478 = sld [smem:[#allocation6 + $0x3e]]
        %v479 = vstv %s478
        %v480 = vmul.f32 %v479, %v470
        %v481 = vmul.f32 %v479, %v471
        %v482 = vadd.f32 %v456, %v480
        %v483 = vadd.f32 %v457, %v481
        %s484 = sld [smem:[#allocation6 + $0x74]]
        %v485 = vstv %s484
        %v486 = vmul.f32 %v485, %v470
        %v487 = vmul.f32 %v485, %v471
        %v488 = vadd.f32 %v462, %v486
        %v489 = vadd.f32 %v463, %v487
        %s490 = scalar_lea.vmem %s184, 16 [#allocation2]
        %v491 = vld [vmem:[%s490] sm:$0xff]
        %v492 = vld [vmem:[%s490 + $0x8] sm:$0xff]
        %v493 = vrot.slane %v491, 7
        %v494 = vrot.slane %v492, 7
        %v495 = vsel %vm243, %v493, %v494
        %v496 = vsel %vm243, %v494, %v493
        %v497 = vsel %vm221, %v496, 0.0
        %v498 = vsel %vm222, %v495, 0.0
        %499 = vrot.lane.b32.xlu0 %v497, 16
        %v500 = vpop.permute.xlu0 %499
        %v501 = vsel %vm248, %v500, %v497
        %502 = vrot.lane.b32.xlu0 %v498, 16
        %v503 = vpop.permute.xlu0 %502
        %v504 = vsel %vm248, %v503, %v498
        %505 = vrot.lane.b32.xlu0 %v501, 16
        %v506 = vpop.permute.xlu0 %505
        %507 = vrot.lane.b32.xlu0 %v504, 16
        %v508 = vpop.permute.xlu0 %507
        %v509 = vsel %vm248, %v506, %v497
        %v510 = vsel %vm248, %v508, %v498
        %513 = vrot.lane.b32.xlu0 %v509, 113
        %v514 = vpop.permute.xlu0 %513
        %515 = vrot.lane.b32.xlu0 %v510, 113
        %v516 = vpop.permute.xlu0 %515
        %v519 = vsel %vm225, %v514, 0.0
        %v520 = vsel %vm225, %v516, 0.0
        %s521 = sld [smem:[#allocation6 + $0x9]]
        %v522 = vstv %s521
        %v523 = vmul.f32 %v522, %v519
        %v524 = vmul.f32 %v522, %v520
        %v525 = vadd.f32 %v476, %v523
        %v526 = vadd.f32 %v477, %v524
        %s527 = sld [smem:[#allocation6 + $0x3f]]
        %v528 = vstv %s527
        %v529 = vmul.f32 %v528, %v519
        %v530 = vmul.f32 %v528, %v520
        %v531 = vadd.f32 %v482, %v529
        %v532 = vadd.f32 %v483, %v530
        %s533 = sld [smem:[#allocation6 + $0x75]]
        %v534 = vstv %s533
        %v535 = vmul.f32 %v534, %v519
        %v536 = vmul.f32 %v534, %v520
        %v537 = vadd.f32 %v488, %v535
        %v538 = vadd.f32 %v489, %v536
        %s539 = sld [smem:[#allocation6 + $0xa]]
        %v540 = vstv %s539
        %v541 = vmul.f32 %v540, %v497
        %v542 = vmul.f32 %v540, %v498
        %v543 = vadd.f32 %v525, %v541
        %v544 = vadd.f32 %v526, %v542
        %s545 = sld [smem:[#allocation6 + $0x40]]
        %v546 = vstv %s545
        %v547 = vmul.f32 %v546, %v497
        %v548 = vmul.f32 %v546, %v498
        %v549 = vadd.f32 %v531, %v547
        %v550 = vadd.f32 %v532, %v548
        %s551 = sld [smem:[#allocation6 + $0x76]]
        %v552 = vstv %s551
        %v553 = vmul.f32 %v552, %v497
        %v554 = vmul.f32 %v552, %v498
        %v555 = vadd.f32 %v537, %v553
        %v556 = vadd.f32 %v538, %v554
        %557 = vrot.lane.b32.xlu0 %v509, 127
        %v558 = vpop.permute.xlu0 %557
        %559 = vrot.lane.b32.xlu0 %v510, 127
        %v560 = vpop.permute.xlu0 %559
        %v563 = vsel %vm226, %v558, 0.0
        %v564 = vsel %vm226, %v560, 0.0
        %s565 = sld [smem:[#allocation6 + $0xb]]
        %v566 = vstv %s565
        %v567 = vmul.f32 %v566, %v563
        %v568 = vmul.f32 %v566, %v564
        %v569 = vadd.f32 %v543, %v567
        %v570 = vadd.f32 %v544, %v568
        %s571 = sld [smem:[#allocation6 + $0x41]]
        %v572 = vstv %s571
        %v573 = vmul.f32 %v572, %v563
        %v574 = vmul.f32 %v572, %v564
        %v575 = vadd.f32 %v549, %v573
        %v576 = vadd.f32 %v550, %v574
        %s577 = sld [smem:[#allocation6 + $0x77]]
        %v578 = vstv %s577
        %v579 = vmul.f32 %v578, %v563
        %v580 = vmul.f32 %v578, %v564
        %v581 = vadd.f32 %v555, %v579
        %v582 = vadd.f32 %v556, %v580
        %583 = vrot.lane.b32.xlu0 %v491, 16
        %v584 = vpop.permute.xlu0 %583
        %v585 = vsel %vm248, %v584, %v491
        %586 = vrot.lane.b32.xlu0 %v492, 16
        %v587 = vpop.permute.xlu0 %586
        %v588 = vsel %vm248, %v587, %v492
        %589 = vrot.lane.b32.xlu0 %v585, 16
        %v590 = vpop.permute.xlu0 %589
        %591 = vrot.lane.b32.xlu0 %v588, 16
        %v592 = vpop.permute.xlu0 %591
        %v593 = vsel %vm248, %v590, %v491
        %v594 = vsel %vm248, %v592, %v492
        %597 = vrot.lane.b32.xlu0 %v593, 113
        %v598 = vpop.permute.xlu0 %597
        %599 = vrot.lane.b32.xlu0 %v594, 113
        %v600 = vpop.permute.xlu0 %599
        %v603 = vsel %vm225, %v598, 0.0
        %v604 = vsel %vm225, %v600, 0.0
        %s605 = sld [smem:[#allocation6 + $0xc]]
        %v606 = vstv %s605
        %v607 = vmul.f32 %v606, %v603
        %v608 = vmul.f32 %v606, %v604
        %v609 = vadd.f32 %v569, %v607
        %v610 = vadd.f32 %v570, %v608
        %s611 = sld [smem:[#allocation6 + $0x42]]
        %v612 = vstv %s611
        %v613 = vmul.f32 %v612, %v603
        %v614 = vmul.f32 %v612, %v604
        %v615 = vadd.f32 %v575, %v613
        %v616 = vadd.f32 %v576, %v614
        %s617 = sld [smem:[#allocation6 + $0x78]]
        %v618 = vstv %s617
        %v619 = vmul.f32 %v618, %v603
        %v620 = vmul.f32 %v618, %v604
        %v621 = vadd.f32 %v581, %v619
        %v622 = vadd.f32 %v582, %v620
        %s623 = sld [smem:[#allocation6 + $0xd]]
        %v624 = vstv %s623
        %v625 = vmul.f32 %v624, %v491
        %v626 = vmul.f32 %v624, %v492
        %v627 = vadd.f32 %v609, %v625
        %v628 = vadd.f32 %v610, %v626
        %s629 = sld [smem:[#allocation6 + $0x43]]
        %v630 = vstv %s629
        %v631 = vmul.f32 %v630, %v491
        %v632 = vmul.f32 %v630, %v492
        %v633 = vadd.f32 %v615, %v631
        %v634 = vadd.f32 %v616, %v632
        %s635 = sld [smem:[#allocation6 + $0x79]]
        %v636 = vstv %s635
        %v637 = vmul.f32 %v636, %v491
        %v638 = vmul.f32 %v636, %v492
        %v639 = vadd.f32 %v621, %v637
        %v640 = vadd.f32 %v622, %v638
        %641 = vrot.lane.b32.xlu0 %v593, 127
        %v642 = vpop.permute.xlu0 %641
        %643 = vrot.lane.b32.xlu0 %v594, 127
        %v644 = vpop.permute.xlu0 %643
        %v647 = vsel %vm226, %v642, 0.0
        %v648 = vsel %vm226, %v644, 0.0
        %s649 = sld [smem:[#allocation6 + $0xe]]
        %v650 = vstv %s649
        %v651 = vmul.f32 %v650, %v647
        %v652 = vmul.f32 %v650, %v648
        %v653 = vadd.f32 %v627, %v651
        %v654 = vadd.f32 %v628, %v652
        %s655 = sld [smem:[#allocation6 + $0x44]]
        %v656 = vstv %s655
        %v657 = vmul.f32 %v656, %v647
        %v658 = vmul.f32 %v656, %v648
        %v659 = vadd.f32 %v633, %v657
        %v660 = vadd.f32 %v634, %v658
        %s661 = sld [smem:[#allocation6 + $0x7a]]
        %v662 = vstv %s661
        %v663 = vmul.f32 %v662, %v647
        %v664 = vmul.f32 %v662, %v648
        %v665 = vadd.f32 %v639, %v663
        %v666 = vadd.f32 %v640, %v664
        %v667 = vrot.slane %v491, 1
        %v668 = vrot.slane %v492, 1
        %v669 = vsel %vm401, %v667, %v668
        %v670 = vsel %vm401, %v668, %v667
        %v671 = vsel %vm223, %v669, 0.0
        %v672 = vsel %vm224, %v670, 0.0
        %673 = vrot.lane.b32.xlu0 %v671, 16
        %v674 = vpop.permute.xlu0 %673
        %v675 = vsel %vm248, %v674, %v671
        %676 = vrot.lane.b32.xlu0 %v672, 16
        %v677 = vpop.permute.xlu0 %676
        %v678 = vsel %vm248, %v677, %v672
        %679 = vrot.lane.b32.xlu0 %v675, 16
        %v680 = vpop.permute.xlu0 %679
        %681 = vrot.lane.b32.xlu0 %v678, 16
        %v682 = vpop.permute.xlu0 %681
        %v683 = vsel %vm248, %v680, %v671
        %v684 = vsel %vm248, %v682, %v672
        %687 = vrot.lane.b32.xlu0 %v683, 113
        %v688 = vpop.permute.xlu0 %687
        %689 = vrot.lane.b32.xlu0 %v684, 113
        %v690 = vpop.permute.xlu0 %689
        %v693 = vsel %vm225, %v688, 0.0
        %v694 = vsel %vm225, %v690, 0.0
        %s695 = sld [smem:[#allocation6 + $0xf]]
        %v696 = vstv %s695
        %v697 = vmul.f32 %v696, %v693
        %v698 = vmul.f32 %v696, %v694
        %v699 = vadd.f32 %v653, %v697
        %v700 = vadd.f32 %v654, %v698
        %s701 = sld [smem:[#allocation6 + $0x45]]
        %v702 = vstv %s701
        %v703 = vmul.f32 %v702, %v693
        %v704 = vmul.f32 %v702, %v694
        %v705 = vadd.f32 %v659, %v703
        %v706 = vadd.f32 %v660, %v704
        %s707 = sld [smem:[#allocation6 + $0x7b]]
        %v708 = vstv %s707
        %v709 = vmul.f32 %v708, %v693
        %v710 = vmul.f32 %v708, %v694
        %v711 = vadd.f32 %v665, %v709
        %v712 = vadd.f32 %v666, %v710
        %s713 = sld [smem:[#allocation6 + $0x10]]
        %v714 = vstv %s713
        %v715 = vmul.f32 %v714, %v671
        %v716 = vmul.f32 %v714, %v672
        %v717 = vadd.f32 %v699, %v715
        %v718 = vadd.f32 %v700, %v716
        %s719 = sld [smem:[#allocation6 + $0x46]]
        %v720 = vstv %s719
        %v721 = vmul.f32 %v720, %v671
        %v722 = vmul.f32 %v720, %v672
        %v723 = vadd.f32 %v705, %v721
        %v724 = vadd.f32 %v706, %v722
        %s725 = sld [smem:[#allocation6 + $0x7c]]
        %v726 = vstv %s725
        %v727 = vmul.f32 %v726, %v671
        %v728 = vmul.f32 %v726, %v672
        %v729 = vadd.f32 %v711, %v727
        %v730 = vadd.f32 %v712, %v728
        %731 = vrot.lane.b32.xlu0 %v683, 127
        %v732 = vpop.permute.xlu0 %731
        %733 = vrot.lane.b32.xlu0 %v684, 127
        %v734 = vpop.permute.xlu0 %733
        %v737 = vsel %vm226, %v732, 0.0
        %v738 = vsel %vm226, %v734, 0.0
        %s739 = sld [smem:[#allocation6 + $0x11]]
        %v740 = vstv %s739
        %v741 = vmul.f32 %v740, %v737
        %v742 = vmul.f32 %v740, %v738
        %v743 = vadd.f32 %v717, %v741
        %v744 = vadd.f32 %v718, %v742
        %s745 = sld [smem:[#allocation6 + $0x47]]
        %v746 = vstv %s745
        %v747 = vmul.f32 %v746, %v737
        %v748 = vmul.f32 %v746, %v738
        %v749 = vadd.f32 %v723, %v747
        %v750 = vadd.f32 %v724, %v748
        %s751 = sld [smem:[#allocation6 + $0x7d]]
        %v752 = vstv %s751
        %v753 = vmul.f32 %v752, %v737
        %v754 = vmul.f32 %v752, %v738
        %v755 = vadd.f32 %v729, %v753
        %v756 = vadd.f32 %v730, %v754
        %s757 = scalar_lea.vmem %s184, 32 [#allocation2]
        %v758 = vld [vmem:[%s757] sm:$0xff]
        %v759 = vld [vmem:[%s757 + $0x8] sm:$0xff]
        %v760 = vrot.slane %v758, 7
        %v761 = vrot.slane %v759, 7
        %v762 = vsel %vm243, %v760, %v761
        %v763 = vsel %vm243, %v761, %v760
        %v764 = vsel %vm221, %v763, 0.0
        %v765 = vsel %vm222, %v762, 0.0
        %766 = vrot.lane.b32.xlu0 %v764, 16
        %v767 = vpop.permute.xlu0 %766
        %v768 = vsel %vm248, %v767, %v764
        %769 = vrot.lane.b32.xlu0 %v765, 16
        %v770 = vpop.permute.xlu0 %769
        %v771 = vsel %vm248, %v770, %v765
        %772 = vrot.lane.b32.xlu0 %v768, 16
        %v773 = vpop.permute.xlu0 %772
        %774 = vrot.lane.b32.xlu0 %v771, 16
        %v775 = vpop.permute.xlu0 %774
        %v776 = vsel %vm248, %v773, %v764
        %v777 = vsel %vm248, %v775, %v765
        %780 = vrot.lane.b32.xlu0 %v776, 113
        %v781 = vpop.permute.xlu0 %780
        %782 = vrot.lane.b32.xlu0 %v777, 113
        %v783 = vpop.permute.xlu0 %782
        %v786 = vsel %vm225, %v781, 0.0
        %v787 = vsel %vm225, %v783, 0.0
        %s788 = sld [smem:[#allocation6 + $0x12]]
        %v789 = vstv %s788
        %v790 = vmul.f32 %v789, %v786
        %v791 = vmul.f32 %v789, %v787
        %v792 = vadd.f32 %v743, %v790
        %v793 = vadd.f32 %v744, %v791
        %s794 = sld [smem:[#allocation6 + $0x48]]
        %v795 = vstv %s794
        %v796 = vmul.f32 %v795, %v786
        %v797 = vmul.f32 %v795, %v787
        %v798 = vadd.f32 %v749, %v796
        %v799 = vadd.f32 %v750, %v797
        %s800 = sld [smem:[#allocation6 + $0x7e]]
        %v801 = vstv %s800
        %v802 = vmul.f32 %v801, %v786
        %v803 = vmul.f32 %v801, %v787
        %v804 = vadd.f32 %v755, %v802
        %v805 = vadd.f32 %v756, %v803
        %s806 = sld [smem:[#allocation6 + $0x13]]
        %v807 = vstv %s806
        %v808 = vmul.f32 %v807, %v764
        %v809 = vmul.f32 %v807, %v765
        %v810 = vadd.f32 %v792, %v808
        %v811 = vadd.f32 %v793, %v809
        %s812 = sld [smem:[#allocation6 + $0x49]]
        %v813 = vstv %s812
        %v814 = vmul.f32 %v813, %v764
        %v815 = vmul.f32 %v813, %v765
        %v816 = vadd.f32 %v798, %v814
        %v817 = vadd.f32 %v799, %v815
        %s818 = sld [smem:[#allocation6 + $0x7f]]
        %v819 = vstv %s818
        %v820 = vmul.f32 %v819, %v764
        %v821 = vmul.f32 %v819, %v765
        %v822 = vadd.f32 %v804, %v820
        %v823 = vadd.f32 %v805, %v821
        %824 = vrot.lane.b32.xlu0 %v776, 127
        %v825 = vpop.permute.xlu0 %824
        %826 = vrot.lane.b32.xlu0 %v777, 127
        %v827 = vpop.permute.xlu0 %826
        %v830 = vsel %vm226, %v825, 0.0
        %v831 = vsel %vm226, %v827, 0.0
        %s832 = sld [smem:[#allocation6 + $0x14]]
        %v833 = vstv %s832
        %v834 = vmul.f32 %v833, %v830
        %v835 = vmul.f32 %v833, %v831
        %v836 = vadd.f32 %v810, %v834
        %v837 = vadd.f32 %v811, %v835
        %s838 = sld [smem:[#allocation6 + $0x4a]]
        %v839 = vstv %s838
        %v840 = vmul.f32 %v839, %v830
        %v841 = vmul.f32 %v839, %v831
        %v842 = vadd.f32 %v816, %v840
        %v843 = vadd.f32 %v817, %v841
        %s844 = sld [smem:[#allocation6 + $0x80]]
        %v845 = vstv %s844
        %v846 = vmul.f32 %v845, %v830
        %v847 = vmul.f32 %v845, %v831
        %v848 = vadd.f32 %v822, %v846
        %v849 = vadd.f32 %v823, %v847
        %850 = vrot.lane.b32.xlu0 %v758, 16
        %v851 = vpop.permute.xlu0 %850
        %v852 = vsel %vm248, %v851, %v758
        %853 = vrot.lane.b32.xlu0 %v759, 16
        %v854 = vpop.permute.xlu0 %853
        %v855 = vsel %vm248, %v854, %v759
        %856 = vrot.lane.b32.xlu0 %v852, 16
        %v857 = vpop.permute.xlu0 %856
        %858 = vrot.lane.b32.xlu0 %v855, 16
        %v859 = vpop.permute.xlu0 %858
        %v860 = vsel %vm248, %v857, %v758
        %v861 = vsel %vm248, %v859, %v759
        %864 = vrot.lane.b32.xlu0 %v860, 113
        %v865 = vpop.permute.xlu0 %864
        %866 = vrot.lane.b32.xlu0 %v861, 113
        %v867 = vpop.permute.xlu0 %866
        %v870 = vsel %vm225, %v865, 0.0
        %v871 = vsel %vm225, %v867, 0.0
        %s872 = sld [smem:[#allocation6 + $0x15]]
        %v873 = vstv %s872
        %v874 = vmul.f32 %v873, %v870
        %v875 = vmul.f32 %v873, %v871
        %v876 = vadd.f32 %v836, %v874
        %v877 = vadd.f32 %v837, %v875
        %s878 = sld [smem:[#allocation6 + $0x4b]]
        %v879 = vstv %s878
        %v880 = vmul.f32 %v879, %v870
        %v881 = vmul.f32 %v879, %v871
        %v882 = vadd.f32 %v842, %v880
        %v883 = vadd.f32 %v843, %v881
        %s884 = sld [smem:[#allocation6 + $0x81]]
        %v885 = vstv %s884
        %v886 = vmul.f32 %v885, %v870
        %v887 = vmul.f32 %v885, %v871
        %v888 = vadd.f32 %v848, %v886
        %v889 = vadd.f32 %v849, %v887
        %s890 = sld [smem:[#allocation6 + $0x16]]
        %v891 = vstv %s890
        %v892 = vmul.f32 %v891, %v758
        %v893 = vmul.f32 %v891, %v759
        %v894 = vadd.f32 %v876, %v892
        %v895 = vadd.f32 %v877, %v893
        %s896 = sld [smem:[#allocation6 + $0x4c]]
        %v897 = vstv %s896
        %v898 = vmul.f32 %v897, %v758
        %v899 = vmul.f32 %v897, %v759
        %v900 = vadd.f32 %v882, %v898
        %v901 = vadd.f32 %v883, %v899
        %s902 = sld [smem:[#allocation6 + $0x82]]
        %v903 = vstv %s902
        %v904 = vmul.f32 %v903, %v758
        %v905 = vmul.f32 %v903, %v759
        %v906 = vadd.f32 %v888, %v904
        %v907 = vadd.f32 %v889, %v905
        %908 = vrot.lane.b32.xlu0 %v860, 127
        %v909 = vpop.permute.xlu0 %908
        %910 = vrot.lane.b32.xlu0 %v861, 127
        %v911 = vpop.permute.xlu0 %910
        %v914 = vsel %vm226, %v909, 0.0
        %v915 = vsel %vm226, %v911, 0.0
        %s916 = sld [smem:[#allocation6 + $0x17]]
        %v917 = vstv %s916
        %v918 = vmul.f32 %v917, %v914
        %v919 = vmul.f32 %v917, %v915
        %v920 = vadd.f32 %v894, %v918
        %v921 = vadd.f32 %v895, %v919
        %s922 = sld [smem:[#allocation6 + $0x4d]]
        %v923 = vstv %s922
        %v924 = vmul.f32 %v923, %v914
        %v925 = vmul.f32 %v923, %v915
        %v926 = vadd.f32 %v900, %v924
        %v927 = vadd.f32 %v901, %v925
        %s928 = sld [smem:[#allocation6 + $0x83]]
        %v929 = vstv %s928
        %v930 = vmul.f32 %v929, %v914
        %v931 = vmul.f32 %v929, %v915
        %v932 = vadd.f32 %v906, %v930
        %v933 = vadd.f32 %v907, %v931
        %v934 = vrot.slane %v758, 1
        %v935 = vrot.slane %v759, 1
        %v936 = vsel %vm401, %v934, %v935
        %v937 = vsel %vm401, %v935, %v934
        %v938 = vsel %vm223, %v936, 0.0
        %v939 = vsel %vm224, %v937, 0.0
        %940 = vrot.lane.b32.xlu0 %v938, 16
        %v941 = vpop.permute.xlu0 %940
        %v942 = vsel %vm248, %v941, %v938
        %943 = vrot.lane.b32.xlu0 %v939, 16
        %v944 = vpop.permute.xlu0 %943
        %v945 = vsel %vm248, %v944, %v939
        %946 = vrot.lane.b32.xlu0 %v942, 16
        %v947 = vpop.permute.xlu0 %946
        %948 = vrot.lane.b32.xlu0 %v945, 16
        %v949 = vpop.permute.xlu0 %948
        %v950 = vsel %vm248, %v947, %v938
        %v951 = vsel %vm248, %v949, %v939
        %954 = vrot.lane.b32.xlu0 %v950, 113
        %v955 = vpop.permute.xlu0 %954
        %956 = vrot.lane.b32.xlu0 %v951, 113
        %v957 = vpop.permute.xlu0 %956
        %v960 = vsel %vm225, %v955, 0.0
        %v961 = vsel %vm225, %v957, 0.0
        %s962 = sld [smem:[#allocation6 + $0x18]]
        %v963 = vstv %s962
        %v964 = vmul.f32 %v963, %v960
        %v965 = vmul.f32 %v963, %v961
        %v966 = vadd.f32 %v920, %v964
        %v967 = vadd.f32 %v921, %v965
        %s968 = sld [smem:[#allocation6 + $0x4e]]
        %v969 = vstv %s968
        %v970 = vmul.f32 %v969, %v960
        %v971 = vmul.f32 %v969, %v961
        %v972 = vadd.f32 %v926, %v970
        %v973 = vadd.f32 %v927, %v971
        %s974 = sld [smem:[#allocation6 + $0x84]]
        %v975 = vstv %s974
        %v976 = vmul.f32 %v975, %v960
        %v977 = vmul.f32 %v975, %v961
        %v978 = vadd.f32 %v932, %v976
        %v979 = vadd.f32 %v933, %v977
        %s980 = sld [smem:[#allocation6 + $0x19]]
        %v981 = vstv %s980
        %v982 = vmul.f32 %v981, %v938
        %v983 = vmul.f32 %v981, %v939
        %v984 = vadd.f32 %v966, %v982
        %v985 = vadd.f32 %v967, %v983
        %s986 = sld [smem:[#allocation6 + $0x4f]]
        %v987 = vstv %s986
        %v988 = vmul.f32 %v987, %v938
        %v989 = vmul.f32 %v987, %v939
        %v990 = vadd.f32 %v972, %v988
        %v991 = vadd.f32 %v973, %v989
        %s992 = sld [smem:[#allocation6 + $0x85]]
        %v993 = vstv %s992
        %v994 = vmul.f32 %v993, %v938
        %v995 = vmul.f32 %v993, %v939
        %v996 = vadd.f32 %v978, %v994
        %v997 = vadd.f32 %v979, %v995
        %998 = vrot.lane.b32.xlu0 %v950, 127
        %v999 = vpop.permute.xlu0 %998
        %1000 = vrot.lane.b32.xlu0 %v951, 127
        %v1001 = vpop.permute.xlu0 %1000
        %v1004 = vsel %vm226, %v999, 0.0
        %v1005 = vsel %vm226, %v1001, 0.0
        %s1006 = sld [smem:[#allocation6 + $0x1a]]
        %v1007 = vstv %s1006
        %v1008 = vmul.f32 %v1007, %v1004
        %v1009 = vmul.f32 %v1007, %v1005
        %v1010 = vadd.f32 %v984, %v1008
        %v1011 = vadd.f32 %v985, %v1009
        %s1012 = sld [smem:[#allocation6 + $0x50]]
        %v1013 = vstv %s1012
        %v1014 = vmul.f32 %v1013, %v1004
        %v1015 = vmul.f32 %v1013, %v1005
        %v1016 = vadd.f32 %v990, %v1014
        %v1017 = vadd.f32 %v991, %v1015
        %s1018 = sld [smem:[#allocation6 + $0x86]]
        %v1019 = vstv %s1018
        %v1020 = vmul.f32 %v1019, %v1004
        %v1021 = vmul.f32 %v1019, %v1005
        %v1022 = vadd.f32 %v996, %v1020
        %v1023 = vadd.f32 %v997, %v1021
        %s1024 = scalar_lea.vmem %s184, 48 [#allocation2]
        %v1025 = vld [vmem:[%s1024] sm:$0xff]
        %v1026 = vld [vmem:[%s1024 + $0x8] sm:$0xff]
        %v1027 = vrot.slane %v1025, 7
        %v1028 = vrot.slane %v1026, 7
        %v1029 = vsel %vm243, %v1027, %v1028
        %v1030 = vsel %vm243, %v1028, %v1027
        %v1031 = vsel %vm221, %v1030, 0.0
        %v1032 = vsel %vm222, %v1029, 0.0
        %1033 = vrot.lane.b32.xlu0 %v1031, 16
        %v1034 = vpop.permute.xlu0 %1033
        %v1035 = vsel %vm248, %v1034, %v1031
        %1036 = vrot.lane.b32.xlu0 %v1032, 16
        %v1037 = vpop.permute.xlu0 %1036
        %v1038 = vsel %vm248, %v1037, %v1032
        %1039 = vrot.lane.b32.xlu0 %v1035, 16
        %v1040 = vpop.permute.xlu0 %1039
        %1041 = vrot.lane.b32.xlu0 %v1038, 16
        %v1042 = vpop.permute.xlu0 %1041
        %v1043 = vsel %vm248, %v1040, %v1031
        %v1044 = vsel %vm248, %v1042, %v1032
        %1047 = vrot.lane.b32.xlu0 %v1043, 113
        %v1048 = vpop.permute.xlu0 %1047
        %1049 = vrot.lane.b32.xlu0 %v1044, 113
        %v1050 = vpop.permute.xlu0 %1049
        %v1053 = vsel %vm225, %v1048, 0.0
        %v1054 = vsel %vm225, %v1050, 0.0
        %s1055 = sld [smem:[#allocation6 + $0x1b]]
        %v1056 = vstv %s1055
        %v1057 = vmul.f32 %v1056, %v1053
        %v1058 = vmul.f32 %v1056, %v1054
        %v1059 = vadd.f32 %v1010, %v1057
        %v1060 = vadd.f32 %v1011, %v1058
        %s1061 = sld [smem:[#allocation6 + $0x51]]
        %v1062 = vstv %s1061
        %v1063 = vmul.f32 %v1062, %v1053
        %v1064 = vmul.f32 %v1062, %v1054
        %v1065 = vadd.f32 %v1016, %v1063
        %v1066 = vadd.f32 %v1017, %v1064
        %s1067 = sld [smem:[#allocation6 + $0x87]]
        %v1068 = vstv %s1067
        %v1069 = vmul.f32 %v1068, %v1053
        %v1070 = vmul.f32 %v1068, %v1054
        %v1071 = vadd.f32 %v1022, %v1069
        %v1072 = vadd.f32 %v1023, %v1070
        %s1073 = sld [smem:[#allocation6 + $0x1c]]
        %v1074 = vstv %s1073
        %v1075 = vmul.f32 %v1074, %v1031
        %v1076 = vmul.f32 %v1074, %v1032
        %v1077 = vadd.f32 %v1059, %v1075
        %v1078 = vadd.f32 %v1060, %v1076
        %s1079 = sld [smem:[#allocation6 + $0x52]]
        %v1080 = vstv %s1079
        %v1081 = vmul.f32 %v1080, %v1031
        %v1082 = vmul.f32 %v1080, %v1032
        %v1083 = vadd.f32 %v1065, %v1081
        %v1084 = vadd.f32 %v1066, %v1082
        %s1085 = sld [smem:[#allocation6 + $0x88]]
        %v1086 = vstv %s1085
        %v1087 = vmul.f32 %v1086, %v1031
        %v1088 = vmul.f32 %v1086, %v1032
        %v1089 = vadd.f32 %v1071, %v1087
        %v1090 = vadd.f32 %v1072, %v1088
        %1091 = vrot.lane.b32.xlu0 %v1043, 127
        %v1092 = vpop.permute.xlu0 %1091
        %1093 = vrot.lane.b32.xlu0 %v1044, 127
        %v1094 = vpop.permute.xlu0 %1093
        %v1097 = vsel %vm226, %v1092, 0.0
        %v1098 = vsel %vm226, %v1094, 0.0
        %s1099 = sld [smem:[#allocation6 + $0x1d]]
        %v1100 = vstv %s1099
        %v1101 = vmul.f32 %v1100, %v1097
        %v1102 = vmul.f32 %v1100, %v1098
        %v1103 = vadd.f32 %v1077, %v1101
        %v1104 = vadd.f32 %v1078, %v1102
        %s1105 = sld [smem:[#allocation6 + $0x53]]
        %v1106 = vstv %s1105
        %v1107 = vmul.f32 %v1106, %v1097
        %v1108 = vmul.f32 %v1106, %v1098
        %v1109 = vadd.f32 %v1083, %v1107
        %v1110 = vadd.f32 %v1084, %v1108
        %s1111 = sld [smem:[#allocation6 + $0x89]]
        %v1112 = vstv %s1111
        %v1113 = vmul.f32 %v1112, %v1097
        %v1114 = vmul.f32 %v1112, %v1098
        %v1115 = vadd.f32 %v1089, %v1113
        %v1116 = vadd.f32 %v1090, %v1114
        %1117 = vrot.lane.b32.xlu0 %v1025, 16
        %v1118 = vpop.permute.xlu0 %1117
        %v1119 = vsel %vm248, %v1118, %v1025
        %1120 = vrot.lane.b32.xlu0 %v1026, 16
        %v1121 = vpop.permute.xlu0 %1120
        %v1122 = vsel %vm248, %v1121, %v1026
        %1123 = vrot.lane.b32.xlu0 %v1119, 16
        %v1124 = vpop.permute.xlu0 %1123
        %1125 = vrot.lane.b32.xlu0 %v1122, 16
        %v1126 = vpop.permute.xlu0 %1125
        %v1127 = vsel %vm248, %v1124, %v1025
        %v1128 = vsel %vm248, %v1126, %v1026
        %1131 = vrot.lane.b32.xlu0 %v1127, 113
        %v1132 = vpop.permute.xlu0 %1131
        %1133 = vrot.lane.b32.xlu0 %v1128, 113
        %v1134 = vpop.permute.xlu0 %1133
        %v1137 = vsel %vm225, %v1132, 0.0
        %v1138 = vsel %vm225, %v1134, 0.0
        %s1139 = sld [smem:[#allocation6 + $0x1e]]
        %v1140 = vstv %s1139
        %v1141 = vmul.f32 %v1140, %v1137
        %v1142 = vmul.f32 %v1140, %v1138
        %v1143 = vadd.f32 %v1103, %v1141
        %v1144 = vadd.f32 %v1104, %v1142
        %s1145 = sld [smem:[#allocation6 + $0x54]]
        %v1146 = vstv %s1145
        %v1147 = vmul.f32 %v1146, %v1137
        %v1148 = vmul.f32 %v1146, %v1138
        %v1149 = vadd.f32 %v1109, %v1147
        %v1150 = vadd.f32 %v1110, %v1148
        %s1151 = sld [smem:[#allocation6 + $0x8a]]
        %v1152 = vstv %s1151
        %v1153 = vmul.f32 %v1152, %v1137
        %v1154 = vmul.f32 %v1152, %v1138
        %v1155 = vadd.f32 %v1115, %v1153
        %v1156 = vadd.f32 %v1116, %v1154
        %s1157 = sld [smem:[#allocation6 + $0x1f]]
        %v1158 = vstv %s1157
        %v1159 = vmul.f32 %v1158, %v1025
        %v1160 = vmul.f32 %v1158, %v1026
        %v1161 = vadd.f32 %v1143, %v1159
        %v1162 = vadd.f32 %v1144, %v1160
        %s1163 = sld [smem:[#allocation6 + $0x55]]
        %v1164 = vstv %s1163
        %v1165 = vmul.f32 %v1164, %v1025
        %v1166 = vmul.f32 %v1164, %v1026
        %v1167 = vadd.f32 %v1149, %v1165
        %v1168 = vadd.f32 %v1150, %v1166
        %s1169 = sld [smem:[#allocation6 + $0x8b]]
        %v1170 = vstv %s1169
        %v1171 = vmul.f32 %v1170, %v1025
        %v1172 = vmul.f32 %v1170, %v1026
        %v1173 = vadd.f32 %v1155, %v1171
        %v1174 = vadd.f32 %v1156, %v1172
        %1175 = vrot.lane.b32.xlu0 %v1127, 127
        %v1176 = vpop.permute.xlu0 %1175
        %1177 = vrot.lane.b32.xlu0 %v1128, 127
        %v1178 = vpop.permute.xlu0 %1177
        %v1181 = vsel %vm226, %v1176, 0.0
        %v1182 = vsel %vm226, %v1178, 0.0
        %s1183 = sld [smem:[#allocation6 + $0x20]]
        %v1184 = vstv %s1183
        %v1185 = vmul.f32 %v1184, %v1181
        %v1186 = vmul.f32 %v1184, %v1182
        %v1187 = vadd.f32 %v1161, %v1185
        %v1188 = vadd.f32 %v1162, %v1186
        %s1189 = sld [smem:[#allocation6 + $0x56]]
        %v1190 = vstv %s1189
        %v1191 = vmul.f32 %v1190, %v1181
        %v1192 = vmul.f32 %v1190, %v1182
        %v1193 = vadd.f32 %v1167, %v1191
        %v1194 = vadd.f32 %v1168, %v1192
        %s1195 = sld [smem:[#allocation6 + $0x8c]]
        %v1196 = vstv %s1195
        %v1197 = vmul.f32 %v1196, %v1181
        %v1198 = vmul.f32 %v1196, %v1182
        %v1199 = vadd.f32 %v1173, %v1197
        %v1200 = vadd.f32 %v1174, %v1198
        %v1201 = vrot.slane %v1025, 1
        %v1202 = vrot.slane %v1026, 1
        %v1203 = vsel %vm401, %v1201, %v1202
        %v1204 = vsel %vm401, %v1202, %v1201
        %v1205 = vsel %vm223, %v1203, 0.0
        %v1206 = vsel %vm224, %v1204, 0.0
        %1207 = vrot.lane.b32.xlu0 %v1205, 16
        %v1208 = vpop.permute.xlu0 %1207
        %v1209 = vsel %vm248, %v1208, %v1205
        %1210 = vrot.lane.b32.xlu0 %v1206, 16
        %v1211 = vpop.permute.xlu0 %1210
        %v1212 = vsel %vm248, %v1211, %v1206
        %1213 = vrot.lane.b32.xlu0 %v1209, 16
        %v1214 = vpop.permute.xlu0 %1213
        %1215 = vrot.lane.b32.xlu0 %v1212, 16
        %v1216 = vpop.permute.xlu0 %1215
        %v1217 = vsel %vm248, %v1214, %v1205
        %v1218 = vsel %vm248, %v1216, %v1206
        %1221 = vrot.lane.b32.xlu0 %v1217, 113
        %v1222 = vpop.permute.xlu0 %1221
        %1223 = vrot.lane.b32.xlu0 %v1218, 113
        %v1224 = vpop.permute.xlu0 %1223
        %v1227 = vsel %vm225, %v1222, 0.0
        %v1228 = vsel %vm225, %v1224, 0.0
        %s1229 = sld [smem:[#allocation6 + $0x21]]
        %v1230 = vstv %s1229
        %v1231 = vmul.f32 %v1230, %v1227
        %v1232 = vmul.f32 %v1230, %v1228
        %v1233 = vadd.f32 %v1187, %v1231
        %v1234 = vadd.f32 %v1188, %v1232
        %s1235 = sld [smem:[#allocation6 + $0x57]]
        %v1236 = vstv %s1235
        %v1237 = vmul.f32 %v1236, %v1227
        %v1238 = vmul.f32 %v1236, %v1228
        %v1239 = vadd.f32 %v1193, %v1237
        %v1240 = vadd.f32 %v1194, %v1238
        %s1241 = sld [smem:[#allocation6 + $0x8d]]
        %v1242 = vstv %s1241
        %v1243 = vmul.f32 %v1242, %v1227
        %v1244 = vmul.f32 %v1242, %v1228
        %v1245 = vadd.f32 %v1199, %v1243
        %v1246 = vadd.f32 %v1200, %v1244
        %s1247 = sld [smem:[#allocation6 + $0x22]]
        %v1248 = vstv %s1247
        %v1249 = vmul.f32 %v1248, %v1205
        %v1250 = vmul.f32 %v1248, %v1206
        %v1251 = vadd.f32 %v1233, %v1249
        %v1252 = vadd.f32 %v1234, %v1250
        %s1253 = sld [smem:[#allocation6 + $0x58]]
        %v1254 = vstv %s1253
        %v1255 = vmul.f32 %v1254, %v1205
        %v1256 = vmul.f32 %v1254, %v1206
        %v1257 = vadd.f32 %v1239, %v1255
        %v1258 = vadd.f32 %v1240, %v1256
        %s1259 = sld [smem:[#allocation6 + $0x8e]]
        %v1260 = vstv %s1259
        %v1261 = vmul.f32 %v1260, %v1205
        %v1262 = vmul.f32 %v1260, %v1206
        %v1263 = vadd.f32 %v1245, %v1261
        %v1264 = vadd.f32 %v1246, %v1262
        %1265 = vrot.lane.b32.xlu0 %v1217, 127
        %v1266 = vpop.permute.xlu0 %1265
        %1267 = vrot.lane.b32.xlu0 %v1218, 127
        %v1268 = vpop.permute.xlu0 %1267
        %v1271 = vsel %vm226, %v1266, 0.0
        %v1272 = vsel %vm226, %v1268, 0.0
        %s1273 = sld [smem:[#allocation6 + $0x23]]
        %v1274 = vstv %s1273
        %v1275 = vmul.f32 %v1274, %v1271
        %v1276 = vmul.f32 %v1274, %v1272
        %v1277 = vadd.f32 %v1251, %v1275
        %v1278 = vadd.f32 %v1252, %v1276
        %s1279 = sld [smem:[#allocation6 + $0x59]]
        %v1280 = vstv %s1279
        %v1281 = vmul.f32 %v1280, %v1271
        %v1282 = vmul.f32 %v1280, %v1272
        %v1283 = vadd.f32 %v1257, %v1281
        %v1284 = vadd.f32 %v1258, %v1282
        %s1285 = sld [smem:[#allocation6 + $0x8f]]
        %v1286 = vstv %s1285
        %v1287 = vmul.f32 %v1286, %v1271
        %v1288 = vmul.f32 %v1286, %v1272
        %v1289 = vadd.f32 %v1263, %v1287
        %v1290 = vadd.f32 %v1264, %v1288
        %s1291 = scalar_lea.vmem %s184, 64 [#allocation2]
        %v1292 = vld [vmem:[%s1291] sm:$0xff]
        %v1293 = vld [vmem:[%s1291 + $0x8] sm:$0xff]
        %v1294 = vrot.slane %v1292, 7
        %v1295 = vrot.slane %v1293, 7
        %v1296 = vsel %vm243, %v1294, %v1295
        %v1297 = vsel %vm243, %v1295, %v1294
        %v1298 = vsel %vm221, %v1297, 0.0
        %v1299 = vsel %vm222, %v1296, 0.0
        %1300 = vrot.lane.b32.xlu0 %v1298, 16
        %v1301 = vpop.permute.xlu0 %1300
        %v1302 = vsel %vm248, %v1301, %v1298
        %1303 = vrot.lane.b32.xlu0 %v1299, 16
        %v1304 = vpop.permute.xlu0 %1303
        %v1305 = vsel %vm248, %v1304, %v1299
        %1306 = vrot.lane.b32.xlu0 %v1302, 16
        %v1307 = vpop.permute.xlu0 %1306
        %1308 = vrot.lane.b32.xlu0 %v1305, 16
        %v1309 = vpop.permute.xlu0 %1308
        %v1310 = vsel %vm248, %v1307, %v1298
        %v1311 = vsel %vm248, %v1309, %v1299
        %1314 = vrot.lane.b32.xlu0 %v1310, 113
        %v1315 = vpop.permute.xlu0 %1314
        %1316 = vrot.lane.b32.xlu0 %v1311, 113
        %v1317 = vpop.permute.xlu0 %1316
        %v1320 = vsel %vm225, %v1315, 0.0
        %v1321 = vsel %vm225, %v1317, 0.0
        %s1322 = sld [smem:[#allocation6 + $0x24]]
        %v1323 = vstv %s1322
        %v1324 = vmul.f32 %v1323, %v1320
        %v1325 = vmul.f32 %v1323, %v1321
        %v1326 = vadd.f32 %v1277, %v1324
        %v1327 = vadd.f32 %v1278, %v1325
        %s1328 = sld [smem:[#allocation6 + $0x5a]]
        %v1329 = vstv %s1328
        %v1330 = vmul.f32 %v1329, %v1320
        %v1331 = vmul.f32 %v1329, %v1321
        %v1332 = vadd.f32 %v1283, %v1330
        %v1333 = vadd.f32 %v1284, %v1331
        %s1334 = sld [smem:[#allocation6 + $0x90]]
        %v1335 = vstv %s1334
        %v1336 = vmul.f32 %v1335, %v1320
        %v1337 = vmul.f32 %v1335, %v1321
        %v1338 = vadd.f32 %v1289, %v1336
        %v1339 = vadd.f32 %v1290, %v1337
        %s1340 = sld [smem:[#allocation6 + $0x25]]
        %v1341 = vstv %s1340
        %v1342 = vmul.f32 %v1341, %v1298
        %v1343 = vmul.f32 %v1341, %v1299
        %v1344 = vadd.f32 %v1326, %v1342
        %v1345 = vadd.f32 %v1327, %v1343
        %s1346 = sld [smem:[#allocation6 + $0x5b]]
        %v1347 = vstv %s1346
        %v1348 = vmul.f32 %v1347, %v1298
        %v1349 = vmul.f32 %v1347, %v1299
        %v1350 = vadd.f32 %v1332, %v1348
        %v1351 = vadd.f32 %v1333, %v1349
        %s1352 = sld [smem:[#allocation6 + $0x91]]
        %v1353 = vstv %s1352
        %v1354 = vmul.f32 %v1353, %v1298
        %v1355 = vmul.f32 %v1353, %v1299
        %v1356 = vadd.f32 %v1338, %v1354
        %v1357 = vadd.f32 %v1339, %v1355
        %1358 = vrot.lane.b32.xlu0 %v1310, 127
        %v1359 = vpop.permute.xlu0 %1358
        %1360 = vrot.lane.b32.xlu0 %v1311, 127
        %v1361 = vpop.permute.xlu0 %1360
        %v1364 = vsel %vm226, %v1359, 0.0
        %v1365 = vsel %vm226, %v1361, 0.0
        %s1366 = sld [smem:[#allocation6 + $0x26]]
        %v1367 = vstv %s1366
        %v1368 = vmul.f32 %v1367, %v1364
        %v1369 = vmul.f32 %v1367, %v1365
        %v1370 = vadd.f32 %v1344, %v1368
        %v1371 = vadd.f32 %v1345, %v1369
        %s1372 = sld [smem:[#allocation6 + $0x5c]]
        %v1373 = vstv %s1372
        %v1374 = vmul.f32 %v1373, %v1364
        %v1375 = vmul.f32 %v1373, %v1365
        %v1376 = vadd.f32 %v1350, %v1374
        %v1377 = vadd.f32 %v1351, %v1375
        %s1378 = sld [smem:[#allocation6 + $0x92]]
        %v1379 = vstv %s1378
        %v1380 = vmul.f32 %v1379, %v1364
        %v1381 = vmul.f32 %v1379, %v1365
        %v1382 = vadd.f32 %v1356, %v1380
        %v1383 = vadd.f32 %v1357, %v1381
        %1384 = vrot.lane.b32.xlu0 %v1292, 16
        %v1385 = vpop.permute.xlu0 %1384
        %v1386 = vsel %vm248, %v1385, %v1292
        %1387 = vrot.lane.b32.xlu0 %v1293, 16
        %v1388 = vpop.permute.xlu0 %1387
        %v1389 = vsel %vm248, %v1388, %v1293
        %1390 = vrot.lane.b32.xlu0 %v1386, 16
        %v1391 = vpop.permute.xlu0 %1390
        %1392 = vrot.lane.b32.xlu0 %v1389, 16
        %v1393 = vpop.permute.xlu0 %1392
        %v1394 = vsel %vm248, %v1391, %v1292
        %v1395 = vsel %vm248, %v1393, %v1293
        %1398 = vrot.lane.b32.xlu0 %v1394, 113
        %v1399 = vpop.permute.xlu0 %1398
        %1400 = vrot.lane.b32.xlu0 %v1395, 113
        %v1401 = vpop.permute.xlu0 %1400
        %v1404 = vsel %vm225, %v1399, 0.0
        %v1405 = vsel %vm225, %v1401, 0.0
        %s1406 = sld [smem:[#allocation6 + $0x27]]
        %v1407 = vstv %s1406
        %v1408 = vmul.f32 %v1407, %v1404
        %v1409 = vmul.f32 %v1407, %v1405
        %v1410 = vadd.f32 %v1370, %v1408
        %v1411 = vadd.f32 %v1371, %v1409
        %s1412 = sld [smem:[#allocation6 + $0x5d]]
        %v1413 = vstv %s1412
        %v1414 = vmul.f32 %v1413, %v1404
        %v1415 = vmul.f32 %v1413, %v1405
        %v1416 = vadd.f32 %v1376, %v1414
        %v1417 = vadd.f32 %v1377, %v1415
        %s1418 = sld [smem:[#allocation6 + $0x93]]
        %v1419 = vstv %s1418
        %v1420 = vmul.f32 %v1419, %v1404
        %v1421 = vmul.f32 %v1419, %v1405
        %v1422 = vadd.f32 %v1382, %v1420
        %v1423 = vadd.f32 %v1383, %v1421
        %s1424 = sld [smem:[#allocation6 + $0x28]]
        %v1425 = vstv %s1424
        %v1426 = vmul.f32 %v1425, %v1292
        %v1427 = vmul.f32 %v1425, %v1293
        %v1428 = vadd.f32 %v1410, %v1426
        %v1429 = vadd.f32 %v1411, %v1427
        %s1430 = sld [smem:[#allocation6 + $0x5e]]
        %v1431 = vstv %s1430
        %v1432 = vmul.f32 %v1431, %v1292
        %v1433 = vmul.f32 %v1431, %v1293
        %v1434 = vadd.f32 %v1416, %v1432
        %v1435 = vadd.f32 %v1417, %v1433
        %s1436 = sld [smem:[#allocation6 + $0x94]]
        %v1437 = vstv %s1436
        %v1438 = vmul.f32 %v1437, %v1292
        %v1439 = vmul.f32 %v1437, %v1293
        %v1440 = vadd.f32 %v1422, %v1438
        %v1441 = vadd.f32 %v1423, %v1439
        %1442 = vrot.lane.b32.xlu0 %v1394, 127
        %v1443 = vpop.permute.xlu0 %1442
        %1444 = vrot.lane.b32.xlu0 %v1395, 127
        %v1445 = vpop.permute.xlu0 %1444
        %v1448 = vsel %vm226, %v1443, 0.0
        %v1449 = vsel %vm226, %v1445, 0.0
        %s1450 = sld [smem:[#allocation6 + $0x29]]
        %v1451 = vstv %s1450
        %v1452 = vmul.f32 %v1451, %v1448
        %v1453 = vmul.f32 %v1451, %v1449
        %v1454 = vadd.f32 %v1428, %v1452
        %v1455 = vadd.f32 %v1429, %v1453
        %s1456 = sld [smem:[#allocation6 + $0x5f]]
        %v1457 = vstv %s1456
        %v1458 = vmul.f32 %v1457, %v1448
        %v1459 = vmul.f32 %v1457, %v1449
        %v1460 = vadd.f32 %v1434, %v1458
        %v1461 = vadd.f32 %v1435, %v1459
        %s1462 = sld [smem:[#allocation6 + $0x95]]
        %v1463 = vstv %s1462
        %v1464 = vmul.f32 %v1463, %v1448
        %v1465 = vmul.f32 %v1463, %v1449
        %v1466 = vadd.f32 %v1440, %v1464
        %v1467 = vadd.f32 %v1441, %v1465
        %v1468 = vrot.slane %v1292, 1
        %v1469 = vrot.slane %v1293, 1
        %v1470 = vsel %vm401, %v1468, %v1469
        %v1471 = vsel %vm401, %v1469, %v1468
        %v1472 = vsel %vm223, %v1470, 0.0
        %v1473 = vsel %vm224, %v1471, 0.0
        %1474 = vrot.lane.b32.xlu0 %v1472, 16
        %v1475 = vpop.permute.xlu0 %1474
        %v1476 = vsel %vm248, %v1475, %v1472
        %1477 = vrot.lane.b32.xlu0 %v1473, 16
        %v1478 = vpop.permute.xlu0 %1477
        %v1479 = vsel %vm248, %v1478, %v1473
        %1480 = vrot.lane.b32.xlu0 %v1476, 16
        %v1481 = vpop.permute.xlu0 %1480
        %1482 = vrot.lane.b32.xlu0 %v1479, 16
        %v1483 = vpop.permute.xlu0 %1482
        %v1484 = vsel %vm248, %v1481, %v1472
        %v1485 = vsel %vm248, %v1483, %v1473
        %1488 = vrot.lane.b32.xlu0 %v1484, 113
        %v1489 = vpop.permute.xlu0 %1488
        %1490 = vrot.lane.b32.xlu0 %v1485, 113
        %v1491 = vpop.permute.xlu0 %1490
        %v1494 = vsel %vm225, %v1489, 0.0
        %v1495 = vsel %vm225, %v1491, 0.0
        %s1496 = sld [smem:[#allocation6 + $0x2a]]
        %v1497 = vstv %s1496
        %v1498 = vmul.f32 %v1497, %v1494
        %v1499 = vmul.f32 %v1497, %v1495
        %v1500 = vadd.f32 %v1454, %v1498
        %v1501 = vadd.f32 %v1455, %v1499
        %s1502 = sld [smem:[#allocation6 + $0x60]]
        %v1503 = vstv %s1502
        %v1504 = vmul.f32 %v1503, %v1494
        %v1505 = vmul.f32 %v1503, %v1495
        %v1506 = vadd.f32 %v1460, %v1504
        %v1507 = vadd.f32 %v1461, %v1505
        %s1508 = sld [smem:[#allocation6 + $0x96]]
        %v1509 = vstv %s1508
        %v1510 = vmul.f32 %v1509, %v1494
        %v1511 = vmul.f32 %v1509, %v1495
        %v1512 = vadd.f32 %v1466, %v1510
        %v1513 = vadd.f32 %v1467, %v1511
        %s1514 = sld [smem:[#allocation6 + $0x2b]]
        %v1515 = vstv %s1514
        %v1516 = vmul.f32 %v1515, %v1472
        %v1517 = vmul.f32 %v1515, %v1473
        %v1518 = vadd.f32 %v1500, %v1516
        %v1519 = vadd.f32 %v1501, %v1517
        %s1520 = sld [smem:[#allocation6 + $0x61]]
        %v1521 = vstv %s1520
        %v1522 = vmul.f32 %v1521, %v1472
        %v1523 = vmul.f32 %v1521, %v1473
        %v1524 = vadd.f32 %v1506, %v1522
        %v1525 = vadd.f32 %v1507, %v1523
        %s1526 = sld [smem:[#allocation6 + $0x97]]
        %v1527 = vstv %s1526
        %v1528 = vmul.f32 %v1527, %v1472
        %v1529 = vmul.f32 %v1527, %v1473
        %v1530 = vadd.f32 %v1512, %v1528
        %v1531 = vadd.f32 %v1513, %v1529
        %1532 = vrot.lane.b32.xlu0 %v1484, 127
        %v1533 = vpop.permute.xlu0 %1532
        %1534 = vrot.lane.b32.xlu0 %v1485, 127
        %v1535 = vpop.permute.xlu0 %1534
        %v1538 = vsel %vm226, %v1533, 0.0
        %v1539 = vsel %vm226, %v1535, 0.0
        %s1540 = sld [smem:[#allocation6 + $0x2c]]
        %v1541 = vstv %s1540
        %v1542 = vmul.f32 %v1541, %v1538
        %v1543 = vmul.f32 %v1541, %v1539
        %v1544 = vadd.f32 %v1518, %v1542
        %v1545 = vadd.f32 %v1519, %v1543
        %s1546 = sld [smem:[#allocation6 + $0x62]]
        %v1547 = vstv %s1546
        %v1548 = vmul.f32 %v1547, %v1538
        %v1549 = vmul.f32 %v1547, %v1539
        %v1550 = vadd.f32 %v1524, %v1548
        %v1551 = vadd.f32 %v1525, %v1549
        %s1552 = sld [smem:[#allocation6 + $0x98]]
        %v1553 = vstv %s1552
        %v1554 = vmul.f32 %v1553, %v1538
        %v1555 = vmul.f32 %v1553, %v1539
        %v1556 = vadd.f32 %v1530, %v1554
        %v1557 = vadd.f32 %v1531, %v1555
        %s1558 = scalar_lea.vmem %s184, 80 [#allocation2]
        %v1559 = vld [vmem:[%s1558] sm:$0xff]
        %v1560 = vld [vmem:[%s1558 + $0x8] sm:$0xff]
        %v1561 = vrot.slane %v1559, 7
        %v1562 = vrot.slane %v1560, 7
        %v1563 = vsel %vm243, %v1561, %v1562
        %v1564 = vsel %vm243, %v1562, %v1561
        %v1565 = vsel %vm221, %v1564, 0.0
        %v1566 = vsel %vm222, %v1563, 0.0
        %1567 = vrot.lane.b32.xlu0 %v1565, 16
        %v1568 = vpop.permute.xlu0 %1567
        %v1569 = vsel %vm248, %v1568, %v1565
        %1570 = vrot.lane.b32.xlu0 %v1566, 16
        %v1571 = vpop.permute.xlu0 %1570
        %v1572 = vsel %vm248, %v1571, %v1566
        %1573 = vrot.lane.b32.xlu0 %v1569, 16
        %v1574 = vpop.permute.xlu0 %1573
        %1575 = vrot.lane.b32.xlu0 %v1572, 16
        %v1576 = vpop.permute.xlu0 %1575
        %v1577 = vsel %vm248, %v1574, %v1565
        %v1578 = vsel %vm248, %v1576, %v1566
        %1581 = vrot.lane.b32.xlu0 %v1577, 113
        %v1582 = vpop.permute.xlu0 %1581
        %1583 = vrot.lane.b32.xlu0 %v1578, 113
        %v1584 = vpop.permute.xlu0 %1583
        %v1587 = vsel %vm225, %v1582, 0.0
        %v1588 = vsel %vm225, %v1584, 0.0
        %s1589 = sld [smem:[#allocation6 + $0x2d]]
        %v1590 = vstv %s1589
        %v1591 = vmul.f32 %v1590, %v1587
        %v1592 = vmul.f32 %v1590, %v1588
        %v1593 = vadd.f32 %v1544, %v1591
        %v1594 = vadd.f32 %v1545, %v1592
        %s1595 = sld [smem:[#allocation6 + $0x63]]
        %v1596 = vstv %s1595
        %v1597 = vmul.f32 %v1596, %v1587
        %v1598 = vmul.f32 %v1596, %v1588
        %v1599 = vadd.f32 %v1550, %v1597
        %v1600 = vadd.f32 %v1551, %v1598
        %s1601 = sld [smem:[#allocation6 + $0x99]]
        %v1602 = vstv %s1601
        %v1603 = vmul.f32 %v1602, %v1587
        %v1604 = vmul.f32 %v1602, %v1588
        %v1605 = vadd.f32 %v1556, %v1603
        %v1606 = vadd.f32 %v1557, %v1604
        %s1607 = sld [smem:[#allocation6 + $0x2e]]
        %v1608 = vstv %s1607
        %v1609 = vmul.f32 %v1608, %v1565
        %v1610 = vmul.f32 %v1608, %v1566
        %v1611 = vadd.f32 %v1593, %v1609
        %v1612 = vadd.f32 %v1594, %v1610
        %s1613 = sld [smem:[#allocation6 + $0x64]]
        %v1614 = vstv %s1613
        %v1615 = vmul.f32 %v1614, %v1565
        %v1616 = vmul.f32 %v1614, %v1566
        %v1617 = vadd.f32 %v1599, %v1615
        %v1618 = vadd.f32 %v1600, %v1616
        %s1619 = sld [smem:[#allocation6 + $0x9a]]
        %v1620 = vstv %s1619
        %v1621 = vmul.f32 %v1620, %v1565
        %v1622 = vmul.f32 %v1620, %v1566
        %v1623 = vadd.f32 %v1605, %v1621
        %v1624 = vadd.f32 %v1606, %v1622
        %1625 = vrot.lane.b32.xlu0 %v1577, 127
        %v1626 = vpop.permute.xlu0 %1625
        %1627 = vrot.lane.b32.xlu0 %v1578, 127
        %v1628 = vpop.permute.xlu0 %1627
        %v1631 = vsel %vm226, %v1626, 0.0
        %v1632 = vsel %vm226, %v1628, 0.0
        %s1633 = sld [smem:[#allocation6 + $0x2f]]
        %v1634 = vstv %s1633
        %v1635 = vmul.f32 %v1634, %v1631
        %v1636 = vmul.f32 %v1634, %v1632
        %v1637 = vadd.f32 %v1611, %v1635
        %v1638 = vadd.f32 %v1612, %v1636
        %s1639 = sld [smem:[#allocation6 + $0x65]]
        %v1640 = vstv %s1639
        %v1641 = vmul.f32 %v1640, %v1631
        %v1642 = vmul.f32 %v1640, %v1632
        %v1643 = vadd.f32 %v1617, %v1641
        %v1644 = vadd.f32 %v1618, %v1642
        %s1645 = sld [smem:[#allocation6 + $0x9b]]
        %v1646 = vstv %s1645
        %v1647 = vmul.f32 %v1646, %v1631
        %v1648 = vmul.f32 %v1646, %v1632
        %v1649 = vadd.f32 %v1623, %v1647
        %v1650 = vadd.f32 %v1624, %v1648
        %1651 = vrot.lane.b32.xlu0 %v1559, 16
        %v1652 = vpop.permute.xlu0 %1651
        %v1653 = vsel %vm248, %v1652, %v1559
        %1654 = vrot.lane.b32.xlu0 %v1560, 16
        %v1655 = vpop.permute.xlu0 %1654
        %v1656 = vsel %vm248, %v1655, %v1560
        %1657 = vrot.lane.b32.xlu0 %v1653, 16
        %v1658 = vpop.permute.xlu0 %1657
        %1659 = vrot.lane.b32.xlu0 %v1656, 16
        %v1660 = vpop.permute.xlu0 %1659
        %v1661 = vsel %vm248, %v1658, %v1559
        %v1662 = vsel %vm248, %v1660, %v1560
        %1665 = vrot.lane.b32.xlu0 %v1661, 113
        %v1666 = vpop.permute.xlu0 %1665
        %1667 = vrot.lane.b32.xlu0 %v1662, 113
        %v1668 = vpop.permute.xlu0 %1667
        %v1671 = vsel %vm225, %v1666, 0.0
        %v1672 = vsel %vm225, %v1668, 0.0
        %s1673 = sld [smem:[#allocation6 + $0x30]]
        %v1674 = vstv %s1673
        %v1675 = vmul.f32 %v1674, %v1671
        %v1676 = vmul.f32 %v1674, %v1672
        %v1677 = vadd.f32 %v1637, %v1675
        %v1678 = vadd.f32 %v1638, %v1676
        %s1679 = sld [smem:[#allocation6 + $0x66]]
        %v1680 = vstv %s1679
        %v1681 = vmul.f32 %v1680, %v1671
        %v1682 = vmul.f32 %v1680, %v1672
        %v1683 = vadd.f32 %v1643, %v1681
        %v1684 = vadd.f32 %v1644, %v1682
        %s1685 = sld [smem:[#allocation6 + $0x9c]]
        %v1686 = vstv %s1685
        %v1687 = vmul.f32 %v1686, %v1671
        %v1688 = vmul.f32 %v1686, %v1672
        %v1689 = vadd.f32 %v1649, %v1687
        %v1690 = vadd.f32 %v1650, %v1688
        %s1691 = sld [smem:[#allocation6 + $0x31]]
        %v1692 = vstv %s1691
        %v1693 = vmul.f32 %v1692, %v1559
        %v1694 = vmul.f32 %v1692, %v1560
        %v1695 = vadd.f32 %v1677, %v1693
        %v1696 = vadd.f32 %v1678, %v1694
        %s1697 = sld [smem:[#allocation6 + $0x67]]
        %v1698 = vstv %s1697
        %v1699 = vmul.f32 %v1698, %v1559
        %v1700 = vmul.f32 %v1698, %v1560
        %v1701 = vadd.f32 %v1683, %v1699
        %v1702 = vadd.f32 %v1684, %v1700
        %s1703 = sld [smem:[#allocation6 + $0x9d]]
        %v1704 = vstv %s1703
        %v1705 = vmul.f32 %v1704, %v1559
        %v1706 = vmul.f32 %v1704, %v1560
        %v1707 = vadd.f32 %v1689, %v1705
        %v1708 = vadd.f32 %v1690, %v1706
        %1709 = vrot.lane.b32.xlu0 %v1661, 127
        %v1710 = vpop.permute.xlu0 %1709
        %1711 = vrot.lane.b32.xlu0 %v1662, 127
        %v1712 = vpop.permute.xlu0 %1711
        %v1715 = vsel %vm226, %v1710, 0.0
        %v1716 = vsel %vm226, %v1712, 0.0
        %s1717 = sld [smem:[#allocation6 + $0x32]]
        %v1718 = vstv %s1717
        %v1719 = vmul.f32 %v1718, %v1715
        %v1720 = vmul.f32 %v1718, %v1716
        %v1721 = vadd.f32 %v1695, %v1719
        %v1722 = vadd.f32 %v1696, %v1720
        %s1723 = sld [smem:[#allocation6 + $0x68]]
        %v1724 = vstv %s1723
        %v1725 = vmul.f32 %v1724, %v1715
        %v1726 = vmul.f32 %v1724, %v1716
        %v1727 = vadd.f32 %v1701, %v1725
        %v1728 = vadd.f32 %v1702, %v1726
        %s1729 = sld [smem:[#allocation6 + $0x9e]]
        %v1730 = vstv %s1729
        %v1731 = vmul.f32 %v1730, %v1715
        %v1732 = vmul.f32 %v1730, %v1716
        %v1733 = vadd.f32 %v1707, %v1731
        %v1734 = vadd.f32 %v1708, %v1732
        %v1735 = vrot.slane %v1559, 1
        %v1736 = vrot.slane %v1560, 1
        %v1737 = vsel %vm401, %v1735, %v1736
        %v1738 = vsel %vm401, %v1736, %v1735
        %v1739 = vsel %vm223, %v1737, 0.0
        %v1740 = vsel %vm224, %v1738, 0.0
        %1741 = vrot.lane.b32.xlu0 %v1739, 16
        %v1742 = vpop.permute.xlu0 %1741
        %v1743 = vsel %vm248, %v1742, %v1739
        %1744 = vrot.lane.b32.xlu0 %v1740, 16
        %v1745 = vpop.permute.xlu0 %1744
        %v1746 = vsel %vm248, %v1745, %v1740
        %1747 = vrot.lane.b32.xlu0 %v1743, 16
        %v1748 = vpop.permute.xlu0 %1747
        %1749 = vrot.lane.b32.xlu0 %v1746, 16
        %v1750 = vpop.permute.xlu0 %1749
        %v1751 = vsel %vm248, %v1748, %v1739
        %v1752 = vsel %vm248, %v1750, %v1740
        %1755 = vrot.lane.b32.xlu0 %v1751, 113
        %v1756 = vpop.permute.xlu0 %1755
        %1757 = vrot.lane.b32.xlu0 %v1752, 113
        %v1758 = vpop.permute.xlu0 %1757
        %v1761 = vsel %vm225, %v1756, 0.0
        %v1762 = vsel %vm225, %v1758, 0.0
        %s1763 = sld [smem:[#allocation6 + $0x33]]
        %v1764 = vstv %s1763
        %v1765 = vmul.f32 %v1764, %v1761
        %v1766 = vmul.f32 %v1764, %v1762
        %v1767 = vadd.f32 %v1721, %v1765
        %v1768 = vadd.f32 %v1722, %v1766
        %s1769 = sld [smem:[#allocation6 + $0x69]]
        %v1770 = vstv %s1769
        %v1771 = vmul.f32 %v1770, %v1761
        %v1772 = vmul.f32 %v1770, %v1762
        %v1773 = vadd.f32 %v1727, %v1771
        %v1774 = vadd.f32 %v1728, %v1772
        %s1775 = sld [smem:[#allocation6 + $0x9f]]
        %v1776 = vstv %s1775
        %v1777 = vmul.f32 %v1776, %v1761
        %v1778 = vmul.f32 %v1776, %v1762
        %v1779 = vadd.f32 %v1733, %v1777
        %v1780 = vadd.f32 %v1734, %v1778
        %s1781 = sld [smem:[#allocation6 + $0x34]]
        %v1782 = vstv %s1781
        %v1783 = vmul.f32 %v1782, %v1739
        %v1784 = vmul.f32 %v1782, %v1740
        %v1785 = vadd.f32 %v1767, %v1783
        %v1786 = vadd.f32 %v1768, %v1784
        %s1787 = sld [smem:[#allocation6 + $0x6a]]
        %v1788 = vstv %s1787
        %v1789 = vmul.f32 %v1788, %v1739
        %v1790 = vmul.f32 %v1788, %v1740
        %v1791 = vadd.f32 %v1773, %v1789
        %v1792 = vadd.f32 %v1774, %v1790
        %s1793 = sld [smem:[#allocation6 + $0xa0]]
        %v1794 = vstv %s1793
        %v1795 = vmul.f32 %v1794, %v1739
        %v1796 = vmul.f32 %v1794, %v1740
        %v1797 = vadd.f32 %v1779, %v1795
        %v1798 = vadd.f32 %v1780, %v1796
        %1799 = vrot.lane.b32.xlu0 %v1751, 127
        %v1800 = vpop.permute.xlu0 %1799
        %1801 = vrot.lane.b32.xlu0 %v1752, 127
        %v1802 = vpop.permute.xlu0 %1801
        %v1805 = vsel %vm226, %v1800, 0.0
        %v1806 = vsel %vm226, %v1802, 0.0
        %s1807 = sld [smem:[#allocation6 + $0x35]]
        %v1808 = vstv %s1807
        %v1809 = vmul.f32 %v1808, %v1805
        %v1810 = vmul.f32 %v1808, %v1806
        %v1811 = vadd.f32 %v1785, %v1809
        %v1812 = vadd.f32 %v1786, %v1810
        %s1813 = sld [smem:[#allocation6 + $0x6b]]
        %v1814 = vstv %s1813
        %v1815 = vmul.f32 %v1814, %v1805
        %v1816 = vmul.f32 %v1814, %v1806
        %v1817 = vadd.f32 %v1791, %v1815
        %v1818 = vadd.f32 %v1792, %v1816
        %s1819 = sld [smem:[#allocation6 + $0xa1]]
        %v1820 = vstv %s1819
        %v1821 = vmul.f32 %v1820, %v1805
        %v1822 = vmul.f32 %v1820, %v1806
        %v1823 = vadd.f32 %v1797, %v1821
        %v1824 = vadd.f32 %v1798, %v1822
        %s1825 = sld [smem:[#allocation7]]
        %v1826 = vstv %s1825
        %v1827 = vadd.f32 %v1811, %v1826
        %v1828 = vadd.f32 %v1812, %v1826
        %vm1829 = vcmask 130048
        %1830 = vst.msk [vmem:[%s215] sm:$0xff] %vm1829, %v1827
        %1831 = vst.msk [vmem:[%s215 + $0x8] sm:$0xff] %vm1829, %v1828
        %s1832 = sld [smem:[#allocation7 + $0x1]]
        %v1833 = vstv %s1832
        %v1834 = vadd.f32 %v1817, %v1833
        %v1835 = vadd.f32 %v1818, %v1833
        %s1836 = scalar_lea.vmem %s215, 16 [#allocation9]
        %1837 = vst.msk [vmem:[%s1836] sm:$0xff] %vm1829, %v1834
        %1838 = vst.msk [vmem:[%s1836 + $0x8] sm:$0xff] %vm1829, %v1835
        %s1839 = sld [smem:[#allocation7 + $0x2]]
        %v1840 = vstv %s1839
        %v1841 = vadd.f32 %v1823, %v1840
        %v1842 = vadd.f32 %v1824, %v1840
        %s1843 = scalar_lea.vmem %s215, 32 [#allocation9]
        %1844 = vst.msk [vmem:[%s1843] sm:$0xff] %vm1829, %v1841
        %1845 = vst.msk [vmem:[%s1843 + $0x8] sm:$0xff] %vm1829, %v1842
        %s1846 = sand.u32 %s98, 1
        %s1847 = scalar_lea.sflag [#allocation4], %s1846
        %s1848 = sand.u32 %s98, 1
        %s1849 = smul.addr %s1848, 48
        %s1850 = scalar_lea.vmem [#allocation9], %s1849
        // Predicated region
        $region45: #{tpu_custom_call.1} parent=31 // pred_check
          %p1851 = pneg %p108
        $region46: #{tpu_custom_call.1} parent=31 // pred_check_branch
          %1853 = sbr.rel (%p1851) target = $region48
        $region47: #{tpu_custom_call.1} parent=31 // pred_region
          %s1855 = ssub.s32 768, 768
          %1856 = vsyncadd %s1847, %s1855
          %s1857 = smul.addr %s22, 6
          %s1858 = smul.addr %s1857, 128
          %s1859 = scalar_lea.hbm %s3, %s1858
          %s1860 = sshll.u32 %s1850, 4
          %s1861 = int_to_ptr.vmem [resolvable:$true] %s1860
          %1866 = dma.vmem_to_hbm [thread:$0]  %s1861, 768, %s1859, %s1847, 128, 128, 8
        $region48: #{tpu_custom_call.1} parent=31 // pred_fallthru
          _
      $region32: #{tpu_custom_call.1} parent=5 // pred_fallthru
        _
      %p1867 = scmp.le.s32.totalorder 2, %s17
      // Predicated region
      $region49: #{tpu_custom_call.1} parent=5 // pred_check
        %p1868 = pneg %p1867
      $region50: #{tpu_custom_call.1} parent=5 // pred_check_branch
        %1870 = sbr.rel (%p1868) target = $region52
      $region51: #{tpu_custom_call.1} parent=5 // pred_region
        %s1871 = ssub.s32 %s17, 2
        // Predicated region
        $region53: #{tpu_custom_call.1} parent=51 // pred_check
          %p1872 = pneg %p114
        $region54: #{tpu_custom_call.1} parent=51 // pred_check_branch
          %1874 = sbr.rel (%p1872) target = $region56
        $region55: #{tpu_custom_call.1} parent=51 // pred_region
          %s1875 = sand.u32 %s99, 1
          %s1876 = scalar_lea.sflag [#allocation4], %s1875
          %s1877 = sand.u32 %s99, 1
          %s1878 = smul.addr %s1877, 48
          %s1879 = scalar_lea.vmem [#allocation9], %s1878
          %1880 = dma.done %s1876, 768
        $region56: #{tpu_custom_call.1} parent=51 // pred_fallthru
          _
      $region52: #{tpu_custom_call.1} parent=5 // pred_fallthru
        _
    $region6: #{tpu_custom_call.1} parent=1 // loop_footer
      %s21 = sadd.s32 1, %s17
    $region7: #{tpu_custom_call.1} parent=1 // loop_footer_branch
      %16 = sbr.rel target = $region3
    $region8: #{tpu_custom_call.1} parent=1 // loop_exit
      _
    %1881 = vsyncpa [#allocation3], 1
    %s1882 = scalar_lea.sflag [#allocation3], 1
    %1883 = vsyncpa %s1882, 1
    %1884 = vsyncpa [#allocation4], 1
    %s1885 = scalar_lea.sflag [#allocation4], 1
    %1886 = vsyncpa %s1885, 1
    %1887 = vsyncpa [#allocation5], 1
    %s1888 = scalar_lea.sflag [#allocation5], 1
    %1889 = vsyncpa %s1888, 1
    %1890 = vsyncpa [#allocation8], 1

</llo_original>
